<compile_context>
chip_gen: v5e
topology: v5e:2x2
jax: 0.10.0
libtpu: 0.0.40
codegen_flags: <defaults>
</compile_context>

<pallas_src>
import functools

import jax
import jax.numpy as jnp
from jax import lax
from jax.experimental import pallas as pl
from jax.experimental.pallas import tpu as pltpu

EPS = 1e-5  # nn.LayerNorm default


def _patch_expand_kernel(x_ref, wt_ref, g_ref, b_ref, o_ref, *, c, th, W):
    """One grid step: th input rows of width W.

    x_ref : (th, W, dim)        dim = 2*c
    wt_ref: (dim, 2*dim)        transposed Linear weight
    g_ref : (1, 2*dim)          gamma tiled 4x (one copy per (p1,p2) slice)
    b_ref : (1, 2*dim)          beta  tiled 4x
    o_ref : (2*th, W, 2*c)      fused-rearrange output block
    """
    dim = 2 * c
    two_c = dim

    # MXU matmul over all th*W pixels at once, f32 accumulation.
    x = x_ref[...].reshape(th * W, dim)
    y = jnp.dot(x, wt_ref[...], preferred_element_type=jnp.float32)  # (th*W, 4c)

    # LayerNorm is applied AFTER the rearrange over the last dim of size c, and the
    # rearrange splits the 4c channel vector into 4 contiguous width-c slices
    # (the 4 (p1,p2) sub-pixels) -> 4 independent per-slice normalizations.
    segs = []
    for s in range(4):
        seg = y[:, s * c:(s + 1) * c]
        mu = jnp.mean(seg, axis=-1, keepdims=True)
        d = seg - mu
        var = jnp.mean(d * d, axis=-1, keepdims=True)
        segs.append(d * lax.rsqrt(var + EPS))
    # Single full-width affine (gamma/beta pre-tiled to 4c lanes in the wrapper).
    y_n = jnp.concatenate(segs, axis=-1) * g_ref[...] + b_ref[...]   # (th*W, 4c)

    # Fused rearrange: output row (2*hh + p1), flattened over (w, p2, ch), equals
    # the p1-th contiguous 2c-wide half of y_n for input row hh.
    for hh in range(th):
        rows = y_n[hh * W:(hh + 1) * W, :]                       # (W, 4c)
        o_ref[2 * hh, :, :] = rows[:, :two_c].astype(o_ref.dtype)
        o_ref[2 * hh + 1, :, :] = rows[:, two_c:].astype(o_ref.dtype)


def _pick_th(R, W, dim, *, max_rows=512, vmem_budget=24 * 1024 * 1024):
    """Choose how many H-rows (of W pixels each) to process per grid step.

    Largest divisor of R whose tile (double-buffered in/out + f32 temporaries +
    weight) fits a conservative VMEM budget, targeting ~512 matmul rows.
    Prefer >= 2 grid steps so pipelining / megacore sharding can engage.
    """
    best = 1
    for d in range(1, R + 1):
        if R % d:
            continue
        rows = d * W
        if d > 1 and rows > max_rows:
            break
        x_b = rows * dim * 4            # x tile (f32)
        o_b = rows * 2 * dim * 4        # out tile
        tmp = rows * 2 * dim * 4 * 2    # y + normalized copy
        w_b = dim * 2 * dim * 4 * 2     # weight (double-buffered)
        if d > 1 and 2 * (x_b + o_b) + tmp + w_b > vmem_budget:
            break
        best = d
    if best > 1 and R // best == 1:
        for d in range(best - 1, 0, -1):
            if R % d == 0:
                best = d
                break
    return best


def patch_expand(x, w_expand, gamma, beta, *, th=None):
    """x: (B, H, W, dim). w_expand: (2*dim, dim) (nn.Linear weight layout).

    Returns (B, 2H, 2W, dim//2), matching PatchExpand.forward.
    """
    B, H, W, dim = x.shape
    assert dim % 2 == 0
    c = dim // 2
    two_dim = 2 * dim
    assert w_expand.shape == (two_dim, dim)
    assert gamma.shape == (c,) and beta.shape == (c,)

    R = B * H
    if th is None:
        th = _pick_th(R, W, dim)
    assert R % th == 0, (R, th)

    x3 = x.reshape(R, W, dim)
    wt = jnp.transpose(w_expand)                    # (dim, 2*dim): y = x @ W^T
    g4 = jnp.tile(gamma, 4).reshape(1, two_dim)     # gamma per (p1,p2) slice
    b4 = jnp.tile(beta, 4).reshape(1, two_dim)

    kernel = functools.partial(_patch_expand_kernel, c=c, th=th, W=W)

    itemsize = jnp.dtype(x.dtype).itemsize
    n_pix = R * W
    cost = pl.CostEstimate(
        flops=2 * n_pix * dim * two_dim,
        transcendentals=0,
        bytes_accessed=(n_pix * dim + dim * two_dim + 2 * two_dim) * itemsize
        + n_pix * two_dim * itemsize,
    )

    y = pl.pallas_call(
        kernel,
        out_shape=jax.ShapeDtypeStruct((2 * R, W, two_dim // 2 * 2 // 2 * 2), x.dtype)
        if False else jax.ShapeDtypeStruct((2 * R, W, 2 * c), x.dtype),
        grid_spec=pltpu.PrefetchScalarGridSpec(
            num_scalar_prefetch=0,
            grid=(R // th,),
            in_specs=[
                pl.BlockSpec((th, W, dim), lambda i: (i, 0, 0)),
                pl.BlockSpec((dim, two_dim), lambda i: (0, 0)),
                pl.BlockSpec((1, two_dim), lambda i: (0, 0)),
                pl.BlockSpec((1, two_dim), lambda i: (0, 0)),
            ],
            out_specs=pl.BlockSpec((2 * th, W, 2 * c), lambda i: (i, 0, 0)),
        ),
        compiler_params=pltpu.CompilerParams(
            dimension_semantics=("parallel",),
            vmem_limit_bytes=48 * 1024 * 1024,
        ),
        cost_estimate=cost,
    )(x3, wt, g4, b4)

    # Pure contiguous view — no data movement:
    # (2*B*H, W, 2c) -> (B, 2H, W, 2c) -> (B, 2H, 2W, c)
    return y.reshape(B, 2 * H, 2 * W, c)


def _reference(x, w_expand, gamma, beta):
    """Pure-JAX reference mirroring the PyTorch module."""
    B, H, W, dim = x.shape
    c = dim // 2
    y = jnp.einsum('bhwd,ed->bhwe', x, w_expand)               # Linear, no bias
    y = y.reshape(B, H, W, 2, 2, c).transpose(0, 1, 3, 2, 4, 5)
    y = y.reshape(B, 2 * H, 2 * W, c)
    mean = jnp.mean(y, axis=-1, keepdims=True)
    var = jnp.mean((y - mean) ** 2, axis=-1, keepdims=True)
    return (y - mean) * lax.rsqrt(var + EPS) * gamma + beta


if __name__ == "__main__":
    key = jax.random.PRNGKey(0)
    k_x, k_w, k_g, k_b = jax.random.split(key, 4)

    B, H, W, dim = 2, 8, 8, 32          # input_resolution=(8, 8), dim=32
    c = dim // 2

    x = jax.random.normal(k_x, (B, H, W, dim), dtype=jnp.float32)
    # nn.Linear(dim, 2*dim, bias=False).weight has shape (2*dim, dim)
    w_expand = jax.random.normal(k_w, (2 * dim, dim), dtype=jnp.float32) * 0.05
    # nn.LayerNorm(dim//2) params (perturbed to exercise the affine path)
    gamma = 1.0 + 0.1 * jax.random.normal(k_g, (c,), dtype=jnp.float32)
    beta = 0.1 * jax.random.normal(k_b, (c,), dtype=jnp.float32)

    out = jax.block_until_ready(patch_expand(x, w_expand, gamma, beta))

    ref = _reference(x, w_expand, gamma, beta)
    assert out.shape == (B, 2 * H, 2 * W, c), out.shape
    assert jnp.allclose(out, ref, atol=1e-4, rtol=1e-4), float(
        jnp.max(jnp.abs(out - ref)))

    print("KERNEL_OK")
</pallas_src>

<mosaic_0001>
module attributes {stable_mosaic.version = 11 : i64} {
  func.func @_patch_expand_kernel(%arg0: i32, %arg1: memref<8x8x32xf32, #tpu.memory_space<vmem>>, %arg2: memref<32x64xf32, #tpu.memory_space<vmem>>, %arg3: memref<1x64xf32, #tpu.memory_space<vmem>>, %arg4: memref<1x64xf32, #tpu.memory_space<vmem>>, %arg5: memref<16x8x32xf32, #tpu.memory_space<vmem>>) attributes {dimension_semantics = [#tpu.dimension_semantics<parallel>], iteration_bounds = array<i64: 2>, scalar_prefetch = 0 : i64, scratch_operands = 0 : i64, tpu.core_type = #tpu.core_type<tc>, window_params = [{transform_indices = @transform_0, window_bounds = array<i64: 8, 8, 32>}, {pipeline_mode = #tpu.pipeline_mode<synchronous>, transform_indices = @transform_1, window_bounds = array<i64: 32, 64>}, {pipeline_mode = #tpu.pipeline_mode<synchronous>, transform_indices = @transform_2, window_bounds = array<i64: 1, 64>}, {pipeline_mode = #tpu.pipeline_mode<synchronous>, transform_indices = @transform_3, window_bounds = array<i64: 1, 64>}, {transform_indices = @transform_4, window_bounds = array<i64: 16, 8, 32>}]} {
    %c0 = arith.constant 0 : index
    %c0_0 = arith.constant 0 : index
    %c0_1 = arith.constant 0 : index
    %0 = vector.load %arg1[%c0, %c0_0, %c0_1] : memref<8x8x32xf32, #tpu.memory_space<vmem>>, vector<8x8x32xf32>
    %1 = vector.shape_cast %0 : vector<8x8x32xf32> to vector<64x32xf32>
    %c0_2 = arith.constant 0 : index
    %c0_3 = arith.constant 0 : index
    %2 = vector.load %arg2[%c0_2, %c0_3] : memref<32x64xf32, #tpu.memory_space<vmem>>, vector<32x64xf32>
    %cst = arith.constant dense<0.000000e+00> : vector<64x64xf32>
    %3 = tpu.matmul %1, %2, %cst {dimension_numbers = #tpu.dot_dimension_numbers<[1], [0], [0], [1], [0, 0, 1, 1], [], []>} : vector<64x32xf32>, vector<32x64xf32>, vector<64x64xf32> -> vector<64x64xf32>
    %4 = vector.extract_strided_slice %3 {offsets = [0, 0], sizes = [64, 16], strides = [1, 1]} : vector<64x64xf32> to vector<64x16xf32>
    %cst_4 = arith.constant dense<0.000000e+00> : vector<64xf32>
    %5 = vector.multi_reduction <add>, %4, %cst_4 [1] : vector<64x16xf32> to vector<64xf32>
    %6 = vector.shape_cast %5 : vector<64xf32> to vector<64x1xf32>
    %cst_5 = arith.constant 1.600000e+01 : f32
    %7 = vector.broadcast %cst_5 : f32 to vector<64x1xf32>
    %8 = arith.divf %6, %7 : vector<64x1xf32>
    %9 = vector.broadcast %8 : vector<64x1xf32> to vector<64x16xf32>
    %10 = arith.subf %4, %9 : vector<64x16xf32>
    %11 = arith.mulf %10, %10 : vector<64x16xf32>
    %cst_6 = arith.constant dense<0.000000e+00> : vector<64xf32>
    %12 = vector.multi_reduction <add>, %11, %cst_6 [1] : vector<64x16xf32> to vector<64xf32>
    %13 = vector.shape_cast %12 : vector<64xf32> to vector<64x1xf32>
    %cst_7 = arith.constant 1.600000e+01 : f32
    %14 = vector.broadcast %cst_7 : f32 to vector<64x1xf32>
    %15 = arith.divf %13, %14 : vector<64x1xf32>
    %cst_8 = arith.constant 9.99999974E-6 : f32
    %16 = vector.broadcast %cst_8 : f32 to vector<64x1xf32>
    %17 = arith.addf %15, %16 : vector<64x1xf32>
    %18 = math.rsqrt %17 : vector<64x1xf32>
    %19 = vector.broadcast %18 : vector<64x1xf32> to vector<64x16xf32>
    %20 = arith.mulf %10, %19 : vector<64x16xf32>
    %21 = vector.extract_strided_slice %3 {offsets = [0, 16], sizes = [64, 16], strides = [1, 1]} : vector<64x64xf32> to vector<64x16xf32>
    %cst_9 = arith.constant dense<0.000000e+00> : vector<64xf32>
    %22 = vector.multi_reduction <add>, %21, %cst_9 [1] : vector<64x16xf32> to vector<64xf32>
    %23 = vector.shape_cast %22 : vector<64xf32> to vector<64x1xf32>
    %cst_10 = arith.constant 1.600000e+01 : f32
    %24 = vector.broadcast %cst_10 : f32 to vector<64x1xf32>
    %25 = arith.divf %23, %24 : vector<64x1xf32>
    %26 = vector.broadcast %25 : vector<64x1xf32> to vector<64x16xf32>
    %27 = arith.subf %21, %26 : vector<64x16xf32>
    %28 = arith.mulf %27, %27 : vector<64x16xf32>
    %cst_11 = arith.constant dense<0.000000e+00> : vector<64xf32>
    %29 = vector.multi_reduction <add>, %28, %cst_11 [1] : vector<64x16xf32> to vector<64xf32>
    %30 = vector.shape_cast %29 : vector<64xf32> to vector<64x1xf32>
    %cst_12 = arith.constant 1.600000e+01 : f32
    %31 = vector.broadcast %cst_12 : f32 to vector<64x1xf32>
    %32 = arith.divf %30, %31 : vector<64x1xf32>
    %cst_13 = arith.constant 9.99999974E-6 : f32
    %33 = vector.broadcast %cst_13 : f32 to vector<64x1xf32>
    %34 = arith.addf %32, %33 : vector<64x1xf32>
    %35 = math.rsqrt %34 : vector<64x1xf32>
    %36 = vector.broadcast %35 : vector<64x1xf32> to vector<64x16xf32>
    %37 = arith.mulf %27, %36 : vector<64x16xf32>
    %38 = vector.extract_strided_slice %3 {offsets = [0, 32], sizes = [64, 16], strides = [1, 1]} : vector<64x64xf32> to vector<64x16xf32>
    %cst_14 = arith.constant dense<0.000000e+00> : vector<64xf32>
    %39 = vector.multi_reduction <add>, %38, %cst_14 [1] : vector<64x16xf32> to vector<64xf32>
    %40 = vector.shape_cast %39 : vector<64xf32> to vector<64x1xf32>
    %cst_15 = arith.constant 1.600000e+01 : f32
    %41 = vector.broadcast %cst_15 : f32 to vector<64x1xf32>
    %42 = arith.divf %40, %41 : vector<64x1xf32>
    %43 = vector.broadcast %42 : vector<64x1xf32> to vector<64x16xf32>
    %44 = arith.subf %38, %43 : vector<64x16xf32>
    %45 = arith.mulf %44, %44 : vector<64x16xf32>
    %cst_16 = arith.constant dense<0.000000e+00> : vector<64xf32>
    %46 = vector.multi_reduction <add>, %45, %cst_16 [1] : vector<64x16xf32> to vector<64xf32>
    %47 = vector.shape_cast %46 : vector<64xf32> to vector<64x1xf32>
    %cst_17 = arith.constant 1.600000e+01 : f32
    %48 = vector.broadcast %cst_17 : f32 to vector<64x1xf32>
    %49 = arith.divf %47, %48 : vector<64x1xf32>
    %cst_18 = arith.constant 9.99999974E-6 : f32
    %50 = vector.broadcast %cst_18 : f32 to vector<64x1xf32>
    %51 = arith.addf %49, %50 : vector<64x1xf32>
    %52 = math.rsqrt %51 : vector<64x1xf32>
    %53 = vector.broadcast %52 : vector<64x1xf32> to vector<64x16xf32>
    %54 = arith.mulf %44, %53 : vector<64x16xf32>
    %55 = vector.extract_strided_slice %3 {offsets = [0, 48], sizes = [64, 16], strides = [1, 1]} : vector<64x64xf32> to vector<64x16xf32>
    %cst_19 = arith.constant dense<0.000000e+00> : vector<64xf32>
    %56 = vector.multi_reduction <add>, %55, %cst_19 [1] : vector<64x16xf32> to vector<64xf32>
    %57 = vector.shape_cast %56 : vector<64xf32> to vector<64x1xf32>
    %cst_20 = arith.constant 1.600000e+01 : f32
    %58 = vector.broadcast %cst_20 : f32 to vector<64x1xf32>
    %59 = arith.divf %57, %58 : vector<64x1xf32>
    %60 = vector.broadcast %59 : vector<64x1xf32> to vector<64x16xf32>
    %61 = arith.subf %55, %60 : vector<64x16xf32>
    %62 = arith.mulf %61, %61 : vector<64x16xf32>
    %cst_21 = arith.constant dense<0.000000e+00> : vector<64xf32>
    %63 = vector.multi_reduction <add>, %62, %cst_21 [1] : vector<64x16xf32> to vector<64xf32>
    %64 = vector.shape_cast %63 : vector<64xf32> to vector<64x1xf32>
    %cst_22 = arith.constant 1.600000e+01 : f32
    %65 = vector.broadcast %cst_22 : f32 to vector<64x1xf32>
    %66 = arith.divf %64, %65 : vector<64x1xf32>
    %cst_23 = arith.constant 9.99999974E-6 : f32
    %67 = vector.broadcast %cst_23 : f32 to vector<64x1xf32>
    %68 = arith.addf %66, %67 : vector<64x1xf32>
    %69 = math.rsqrt %68 : vector<64x1xf32>
    %70 = vector.broadcast %69 : vector<64x1xf32> to vector<64x16xf32>
    %71 = arith.mulf %61, %70 : vector<64x16xf32>
    %72 = tpu.concatenate %20, %37, %54, %71 in 1 : vector<64x16xf32>, vector<64x16xf32>, vector<64x16xf32>, vector<64x16xf32> -> vector<64x64xf32>
    %c0_24 = arith.constant 0 : index
    %c0_25 = arith.constant 0 : index
    %73 = vector.load %arg3[%c0_24, %c0_25] : memref<1x64xf32, #tpu.memory_space<vmem>>, vector<1x64xf32>
    %74 = vector.broadcast %73 : vector<1x64xf32> to vector<64x64xf32>
    %75 = arith.mulf %72, %74 : vector<64x64xf32>
    %c0_26 = arith.constant 0 : index
    %c0_27 = arith.constant 0 : index
    %76 = vector.load %arg4[%c0_26, %c0_27] : memref<1x64xf32, #tpu.memory_space<vmem>>, vector<1x64xf32>
    %77 = vector.broadcast %76 : vector<1x64xf32> to vector<64x64xf32>
    %78 = arith.addf %75, %77 : vector<64x64xf32>
    %79 = vector.extract_strided_slice %78 {offsets = [0, 0], sizes = [8, 64], strides = [1, 1]} : vector<64x64xf32> to vector<8x64xf32>
    %80 = vector.extract_strided_slice %79 {offsets = [0, 0], sizes = [8, 32], strides = [1, 1]} : vector<8x64xf32> to vector<8x32xf32>
    %c0_28 = arith.constant 0 : index
    %c0_29 = arith.constant 0 : index
    %c0_30 = arith.constant 0 : index
    %81 = vector.load %arg5[%c0_28, %c0_29, %c0_30] : memref<16x8x32xf32, #tpu.memory_space<vmem>>, vector<1x8x32xf32>
    %82 = vector.shape_cast %81 : vector<1x8x32xf32> to vector<8x32xf32>
    %83 = vector.shape_cast %80 : vector<8x32xf32> to vector<1x8x32xf32>
    tpu.vector_store %arg5[%c0_28, %c0_29, %c0_30], %83 {strides = array<i32>} : memref<16x8x32xf32, #tpu.memory_space<vmem>>, vector<1x8x32xf32>,
    %84 = vector.extract_strided_slice %79 {offsets = [0, 32], sizes = [8, 32], strides = [1, 1]} : vector<8x64xf32> to vector<8x32xf32>
    %c1 = arith.constant 1 : index
    %c0_31 = arith.constant 0 : index
    %c0_32 = arith.constant 0 : index
    %85 = vector.load %arg5[%c1, %c0_31, %c0_32] : memref<16x8x32xf32, #tpu.memory_space<vmem>>, vector<1x8x32xf32>
    %86 = vector.shape_cast %85 : vector<1x8x32xf32> to vector<8x32xf32>
    %87 = vector.shape_cast %84 : vector<8x32xf32> to vector<1x8x32xf32>
    tpu.vector_store %arg5[%c1, %c0_31, %c0_32], %87 {strides = array<i32>} : memref<16x8x32xf32, #tpu.memory_space<vmem>>, vector<1x8x32xf32>,
    %88 = vector.extract_strided_slice %78 {offsets = [8, 0], sizes = [8, 64], strides = [1, 1]} : vector<64x64xf32> to vector<8x64xf32>
    %89 = vector.extract_strided_slice %88 {offsets = [0, 0], sizes = [8, 32], strides = [1, 1]} : vector<8x64xf32> to vector<8x32xf32>
    %c2 = arith.constant 2 : index
    %c0_33 = arith.constant 0 : index
    %c0_34 = arith.constant 0 : index
    %90 = vector.load %arg5[%c2, %c0_33, %c0_34] : memref<16x8x32xf32, #tpu.memory_space<vmem>>, vector<1x8x32xf32>
    %91 = vector.shape_cast %90 : vector<1x8x32xf32> to vector<8x32xf32>
    %92 = vector.shape_cast %89 : vector<8x32xf32> to vector<1x8x32xf32>
    tpu.vector_store %arg5[%c2, %c0_33, %c0_34], %92 {strides = array<i32>} : memref<16x8x32xf32, #tpu.memory_space<vmem>>, vector<1x8x32xf32>,
    %93 = vector.extract_strided_slice %88 {offsets = [0, 32], sizes = [8, 32], strides = [1, 1]} : vector<8x64xf32> to vector<8x32xf32>
    %c3 = arith.constant 3 : index
    %c0_35 = arith.constant 0 : index
    %c0_36 = arith.constant 0 : index
    %94 = vector.load %arg5[%c3, %c0_35, %c0_36] : memref<16x8x32xf32, #tpu.memory_space<vmem>>, vector<1x8x32xf32>
    %95 = vector.shape_cast %94 : vector<1x8x32xf32> to vector<8x32xf32>
    %96 = vector.shape_cast %93 : vector<8x32xf32> to vector<1x8x32xf32>
    tpu.vector_store %arg5[%c3, %c0_35, %c0_36], %96 {strides = array<i32>} : memref<16x8x32xf32, #tpu.memory_space<vmem>>, vector<1x8x32xf32>,
    %97 = vector.extract_strided_slice %78 {offsets = [16, 0], sizes = [8, 64], strides = [1, 1]} : vector<64x64xf32> to vector<8x64xf32>
    %98 = vector.extract_strided_slice %97 {offsets = [0, 0], sizes = [8, 32], strides = [1, 1]} : vector<8x64xf32> to vector<8x32xf32>
    %c4 = arith.constant 4 : index
    %c0_37 = arith.constant 0 : index
    %c0_38 = arith.constant 0 : index
    %99 = vector.load %arg5[%c4, %c0_37, %c0_38] : memref<16x8x32xf32, #tpu.memory_space<vmem>>, vector<1x8x32xf32>
    %100 = vector.shape_cast %99 : vector<1x8x32xf32> to vector<8x32xf32>
    %101 = vector.shape_cast %98 : vector<8x32xf32> to vector<1x8x32xf32>
    tpu.vector_store %arg5[%c4, %c0_37, %c0_38], %101 {strides = array<i32>} : memref<16x8x32xf32, #tpu.memory_space<vmem>>, vector<1x8x32xf32>,
    %102 = vector.extract_strided_slice %97 {offsets = [0, 32], sizes = [8, 32], strides = [1, 1]} : vector<8x64xf32> to vector<8x32xf32>
    %c5 = arith.constant 5 : index
    %c0_39 = arith.constant 0 : index
    %c0_40 = arith.constant 0 : index
    %103 = vector.load %arg5[%c5, %c0_39, %c0_40] : memref<16x8x32xf32, #tpu.memory_space<vmem>>, vector<1x8x32xf32>
    %104 = vector.shape_cast %103 : vector<1x8x32xf32> to vector<8x32xf32>
    %105 = vector.shape_cast %102 : vector<8x32xf32> to vector<1x8x32xf32>
    tpu.vector_store %arg5[%c5, %c0_39, %c0_40], %105 {strides = array<i32>} : memref<16x8x32xf32, #tpu.memory_space<vmem>>, vector<1x8x32xf32>,
    %106 = vector.extract_strided_slice %78 {offsets = [24, 0], sizes = [8, 64], strides = [1, 1]} : vector<64x64xf32> to vector<8x64xf32>
    %107 = vector.extract_strided_slice %106 {offsets = [0, 0], sizes = [8, 32], strides = [1, 1]} : vector<8x64xf32> to vector<8x32xf32>
    %c6 = arith.constant 6 : index
    %c0_41 = arith.constant 0 : index
    %c0_42 = arith.constant 0 : index
    %108 = vector.load %arg5[%c6, %c0_41, %c0_42] : memref<16x8x32xf32, #tpu.memory_space<vmem>>, vector<1x8x32xf32>
    %109 = vector.shape_cast %108 : vector<1x8x32xf32> to vector<8x32xf32>
    %110 = vector.shape_cast %107 : vector<8x32xf32> to vector<1x8x32xf32>
    tpu.vector_store %arg5[%c6, %c0_41, %c0_42], %110 {strides = array<i32>} : memref<16x8x32xf32, #tpu.memory_space<vmem>>, vector<1x8x32xf32>,
    %111 = vector.extract_strided_slice %106 {offsets = [0, 32], sizes = [8, 32], strides = [1, 1]} : vector<8x64xf32> to vector<8x32xf32>
    %c7 = arith.constant 7 : index
    %c0_43 = arith.constant 0 : index
    %c0_44 = arith.constant 0 : index
    %112 = vector.load %arg5[%c7, %c0_43, %c0_44] : memref<16x8x32xf32, #tpu.memory_space<vmem>>, vector<1x8x32xf32>
    %113 = vector.shape_cast %112 : vector<1x8x32xf32> to vector<8x32xf32>
    %114 = vector.shape_cast %111 : vector<8x32xf32> to vector<1x8x32xf32>
    tpu.vector_store %arg5[%c7, %c0_43, %c0_44], %114 {strides = array<i32>} : memref<16x8x32xf32, #tpu.memory_space<vmem>>, vector<1x8x32xf32>,
    %115 = vector.extract_strided_slice %78 {offsets = [32, 0], sizes = [8, 64], strides = [1, 1]} : vector<64x64xf32> to vector<8x64xf32>
    %116 = vector.extract_strided_slice %115 {offsets = [0, 0], sizes = [8, 32], strides = [1, 1]} : vector<8x64xf32> to vector<8x32xf32>
    %c8 = arith.constant 8 : index
    %c0_45 = arith.constant 0 : index
    %c0_46 = arith.constant 0 : index
    %117 = vector.load %arg5[%c8, %c0_45, %c0_46] : memref<16x8x32xf32, #tpu.memory_space<vmem>>, vector<1x8x32xf32>
    %118 = vector.shape_cast %117 : vector<1x8x32xf32> to vector<8x32xf32>
    %119 = vector.shape_cast %116 : vector<8x32xf32> to vector<1x8x32xf32>
    tpu.vector_store %arg5[%c8, %c0_45, %c0_46], %119 {strides = array<i32>} : memref<16x8x32xf32, #tpu.memory_space<vmem>>, vector<1x8x32xf32>,
    %120 = vector.extract_strided_slice %115 {offsets = [0, 32], sizes = [8, 32], strides = [1, 1]} : vector<8x64xf32> to vector<8x32xf32>
    %c9 = arith.constant 9 : index
    %c0_47 = arith.constant 0 : index
    %c0_48 = arith.constant 0 : index
    %121 = vector.load %arg5[%c9, %c0_47, %c0_48] : memref<16x8x32xf32, #tpu.memory_space<vmem>>, vector<1x8x32xf32>
    %122 = vector.shape_cast %121 : vector<1x8x32xf32> to vector<8x32xf32>
    %123 = vector.shape_cast %120 : vector<8x32xf32> to vector<1x8x32xf32>
    tpu.vector_store %arg5[%c9, %c0_47, %c0_48], %123 {strides = array<i32>} : memref<16x8x32xf32, #tpu.memory_space<vmem>>, vector<1x8x32xf32>,
    %124 = vector.extract_strided_slice %78 {offsets = [40, 0], sizes = [8, 64], strides = [1, 1]} : vector<64x64xf32> to vector<8x64xf32>
    %125 = vector.extract_strided_slice %124 {offsets = [0, 0], sizes = [8, 32], strides = [1, 1]} : vector<8x64xf32> to vector<8x32xf32>
    %c10 = arith.constant 10 : index
    %c0_49 = arith.constant 0 : index
    %c0_50 = arith.constant 0 : index
    %126 = vector.load %arg5[%c10, %c0_49, %c0_50] : memref<16x8x32xf32, #tpu.memory_space<vmem>>, vector<1x8x32xf32>
    %127 = vector.shape_cast %126 : vector<1x8x32xf32> to vector<8x32xf32>
    %128 = vector.shape_cast %125 : vector<8x32xf32> to vector<1x8x32xf32>
    tpu.vector_store %arg5[%c10, %c0_49, %c0_50], %128 {strides = array<i32>} : memref<16x8x32xf32, #tpu.memory_space<vmem>>, vector<1x8x32xf32>,
    %129 = vector.extract_strided_slice %124 {offsets = [0, 32], sizes = [8, 32], strides = [1, 1]} : vector<8x64xf32> to vector<8x32xf32>
    %c11 = arith.constant 11 : index
    %c0_51 = arith.constant 0 : index
    %c0_52 = arith.constant 0 : index
    %130 = vector.load %arg5[%c11, %c0_51, %c0_52] : memref<16x8x32xf32, #tpu.memory_space<vmem>>, vector<1x8x32xf32>
    %131 = vector.shape_cast %130 : vector<1x8x32xf32> to vector<8x32xf32>
    %132 = vector.shape_cast %129 : vector<8x32xf32> to vector<1x8x32xf32>
    tpu.vector_store %arg5[%c11, %c0_51, %c0_52], %132 {strides = array<i32>} : memref<16x8x32xf32, #tpu.memory_space<vmem>>, vector<1x8x32xf32>,
    %133 = vector.extract_strided_slice %78 {offsets = [48, 0], sizes = [8, 64], strides = [1, 1]} : vector<64x64xf32> to vector<8x64xf32>
    %134 = vector.extract_strided_slice %133 {offsets = [0, 0], sizes = [8, 32], strides = [1, 1]} : vector<8x64xf32> to vector<8x32xf32>
    %c12 = arith.constant 12 : index
    %c0_53 = arith.constant 0 : index
    %c0_54 = arith.constant 0 : index
    %135 = vector.load %arg5[%c12, %c0_53, %c0_54] : memref<16x8x32xf32, #tpu.memory_space<vmem>>, vector<1x8x32xf32>
    %136 = vector.shape_cast %135 : vector<1x8x32xf32> to vector<8x32xf32>
    %137 = vector.shape_cast %134 : vector<8x32xf32> to vector<1x8x32xf32>
    tpu.vector_store %arg5[%c12, %c0_53, %c0_54], %137 {strides = array<i32>} : memref<16x8x32xf32, #tpu.memory_space<vmem>>, vector<1x8x32xf32>,
    %138 = vector.extract_strided_slice %133 {offsets = [0, 32], sizes = [8, 32], strides = [1, 1]} : vector<8x64xf32> to vector<8x32xf32>
    %c13 = arith.constant 13 : index
    %c0_55 = arith.constant 0 : index
    %c0_56 = arith.constant 0 : index
    %139 = vector.load %arg5[%c13, %c0_55, %c0_56] : memref<16x8x32xf32, #tpu.memory_space<vmem>>, vector<1x8x32xf32>
    %140 = vector.shape_cast %139 : vector<1x8x32xf32> to vector<8x32xf32>
    %141 = vector.shape_cast %138 : vector<8x32xf32> to vector<1x8x32xf32>
    tpu.vector_store %arg5[%c13, %c0_55, %c0_56], %141 {strides = array<i32>} : memref<16x8x32xf32, #tpu.memory_space<vmem>>, vector<1x8x32xf32>,
    %142 = vector.extract_strided_slice %78 {offsets = [56, 0], sizes = [8, 64], strides = [1, 1]} : vector<64x64xf32> to vector<8x64xf32>
    %143 = vector.extract_strided_slice %142 {offsets = [0, 0], sizes = [8, 32], strides = [1, 1]} : vector<8x64xf32> to vector<8x32xf32>
    %c14 = arith.constant 14 : index
    %c0_57 = arith.constant 0 : index
    %c0_58 = arith.constant 0 : index
    %144 = vector.load %arg5[%c14, %c0_57, %c0_58] : memref<16x8x32xf32, #tpu.memory_space<vmem>>, vector<1x8x32xf32>
    %145 = vector.shape_cast %144 : vector<1x8x32xf32> to vector<8x32xf32>
    %146 = vector.shape_cast %143 : vector<8x32xf32> to vector<1x8x32xf32>
    tpu.vector_store %arg5[%c14, %c0_57, %c0_58], %146 {strides = array<i32>} : memref<16x8x32xf32, #tpu.memory_space<vmem>>, vector<1x8x32xf32>,
    %147 = vector.extract_strided_slice %142 {offsets = [0, 32], sizes = [8, 32], strides = [1, 1]} : vector<8x64xf32> to vector<8x32xf32>
    %c15 = arith.constant 15 : index
    %c0_59 = arith.constant 0 : index
    %c0_60 = arith.constant 0 : index
    %148 = vector.load %arg5[%c15, %c0_59, %c0_60] : memref<16x8x32xf32, #tpu.memory_space<vmem>>, vector<1x8x32xf32>
    %149 = vector.shape_cast %148 : vector<1x8x32xf32> to vector<8x32xf32>
    %150 = vector.shape_cast %147 : vector<8x32xf32> to vector<1x8x32xf32>
    tpu.vector_store %arg5[%c15, %c0_59, %c0_60], %150 {strides = array<i32>} : memref<16x8x32xf32, #tpu.memory_space<vmem>>, vector<1x8x32xf32>,
    return
  }
  func.func @transform_0(%arg0: i32) -> (i32, i32, i32) {
    %c0_i32 = arith.constant 0 : i32
    %c0_i32_0 = arith.constant 0 : i32
    %c0_i32_1 = arith.constant 0 : i32
    return %arg0, %c0_i32, %c0_i32_0 : i32, i32, i32
  }
  func.func @transform_1(%arg0: i32) -> (i32, i32) {
    %c0_i32 = arith.constant 0 : i32
    %c0_i32_0 = arith.constant 0 : i32
    %c0_i32_1 = arith.constant 0 : i32
    return %c0_i32, %c0_i32_0 : i32, i32
  }
  func.func @transform_2(%arg0: i32) -> (i32, i32) {
    %c0_i32 = arith.constant 0 : i32
    %c0_i32_0 = arith.constant 0 : i32
    %c0_i32_1 = arith.constant 0 : i32
    return %c0_i32, %c0_i32_0 : i32, i32
  }
  func.func @transform_3(%arg0: i32) -> (i32, i32) {
    %c0_i32 = arith.constant 0 : i32
    %c0_i32_0 = arith.constant 0 : i32
    %c0_i32_1 = arith.constant 0 : i32
    return %c0_i32, %c0_i32_0 : i32, i32
  }
  func.func @transform_4(%arg0: i32) -> (i32, i32, i32) {
    %c0_i32 = arith.constant 0 : i32
    %c0_i32_0 = arith.constant 0 : i32
    %c0_i32_1 = arith.constant 0 : i32
    return %arg0, %c0_i32, %c0_i32_0 : i32, i32, i32
  }
}

</mosaic_0001>

<llo_original>
// kernel: tpu_custom_call.1
$region0: #{tpu_custom_call.1}
  #allocation0 [shape = 'u32[]', space=smem, size = 0x4, offset = 0x4, fixed_abs, tag = 'smem constant byte address 0x4 - core index']
  #allocation1 [shape = 'u32[72,128]{1,0:T(1,128)}', space=vmem, size = 0x9000, scoped, tag = 'internal scratch']
  %s0 = inlined_call_operand.hbm [shape: f32[16,8,32], index: 0, kind: input, shape index: {}]
  %s1 = inlined_call_operand.hbm [shape: f32[32,64], index: 1, kind: input, shape index: {}]
  %s2 = inlined_call_operand.vmem [shape: f32[1,64], index: 2, kind: input, shape index: {}]
  %s3 = inlined_call_operand.vmem [shape: f32[1,64], index: 3, kind: input, shape index: {}]
  %s4 = inlined_call_operand.hbm [shape: f32[32,8,32], index: 4, kind: output, shape index: {}]
  %s5 = sld [smem:[#allocation0]]
  $region57: #{tpu_custom_call.1} parent=0
    _
  %s7 = ssub.s32 1, %s5
  %s8 = scalar_select 0, %s7, %s5
  $region1: #{tpu_custom_call.1} parent=0
    #allocation2 [shape = 'u8[65536]{0}', space=vmem, size = 0x10000, scoped, tag = 'input window, operand 0']
    #allocation3 [shape = 's32[2]{0}', space=sflag, size = 0x8, scoped, tag = 'scoped memory for tpu_custom_call.1']
    #allocation4 [shape = 's32[2]{0}', space=sflag, size = 0x8, scoped, tag = 'scoped memory for tpu_custom_call.1']
    #allocation5 [shape = 'u8[16384]{0}', space=vmem, size = 0x4000, scoped, tag = 'input window, operand 1, single buffered']
    #allocation6 [shape = 's32[1]{0}', space=sflag, size = 0x4, scoped, tag = 'scoped memory for tpu_custom_call.1']
    #allocation7 [shape = 'u8[131072]{0}', space=vmem, size = 0x20000, scoped, tag = 'output window, operand 0']
    %9 = vsyncpa [#allocation3], 0
    %s10 = scalar_lea.sflag [#allocation3], 1
    %11 = vsyncpa %s10, 0
    %12 = vsyncpa [#allocation6], 0
    %13 = vsyncpa [#allocation4], 0
    %s14 = scalar_lea.sflag [#allocation4], 1
    %15 = vsyncpa %s14, 0
    loop: start=0, step=1, limit=4
    $region2: #{tpu_custom_call.1} parent=1 // loop_pre_header
      _
    $region3: #{tpu_custom_call.1} parent=1 // loop_header
      %s17 = sphi 0, %s21
      %p18 = scmp.ge.s32.totalorder %s17, 4
      %s27 = sphi 0, %s29
      %s30 = sphi 0, %s27
      %s31 = sphi 0, %s30
      %s47 = sphi 0, %s31
      %s51 = sphi 0, %s51
      %s53 = sphi 0, %s51
      %s54 = sphi 0, %s53
      %s68 = sphi 0, %s54
      %s72 = sphi 0, %s72
      %s74 = sphi 0, %s72
      %s75 = sphi 0, %s74
      %s89 = sphi 0, %s75
      %s93 = sphi 0, %s93
      %s95 = sphi 0, %s93
      %s96 = sphi 0, %s95
      %s110 = sphi 0, %s96
      %s116 = sphi 0, %s118
      %s119 = sphi 0, %s116
      %s120 = sphi 0, %s119
      %s136 = sphi 0, %s120
    $region4: #{tpu_custom_call.1} parent=1 // loop_header_branch
      %20 = sbr.rel (%p18) target = $region8
    $region5: #{tpu_custom_call.1} parent=1 // loop_body
      %s22 = ssub.s32 %s17, 1
      %s23 = ssub.s32 %s17, 2
      %s24 = sadd.s32 %s17, 1
      %s25 = ssub.s32 %s17, %s24
      %p26 = scmp.eq.s32.totalorder %s25, 0
      %s28 = sadd.s32 %s27, 1
      %s29 = scalar_select %p26, %s27, %s28
      %p32 = pneg %p26
      %p33 = scmp.eq.s32.totalorder %s17, 1
      %p34 = por %p32, %p33
      %p35 = scmp.ne.s32.totalorder %s27, %s30
      %p36 = scmp.eq.s32.totalorder %s17, 0
      %p37 = por %p35, %p36
      %p38 = scmp.ne.s32.totalorder %s27, %s30
      %p39 = scmp.eq.s32.totalorder %s22, 1
      %p40 = por %p38, %p39
      %p41 = scmp.ne.s32.totalorder %s30, %s31
      %p42 = scmp.eq.s32.totalorder %s22, 0
      %p43 = por %p41, %p42
      %p44 = scmp.ne.s32.totalorder %s30, %s31
      %p45 = scmp.eq.s32.totalorder %s23, 1
      %p46 = por %p44, %p45
      %p48 = scmp.ne.s32.totalorder %s31, %s47
      %p49 = scmp.eq.s32.totalorder %s23, 0
      %p50 = por %p48, %p49
      %s52 = sadd.s32 %s51, 1
      %p55 = scmp.eq.s32.totalorder %s17, 1
      %p56 = scmp.ne.s32.totalorder %s51, %s53
      %p57 = scmp.eq.s32.totalorder %s17, 0
      %p58 = por %p56, %p57
      %p59 = scmp.ne.s32.totalorder %s51, %s53
      %p60 = scmp.eq.s32.totalorder %s22, 1
      %p61 = por %p59, %p60
      %p62 = scmp.ne.s32.totalorder %s53, %s54
      %p63 = scmp.eq.s32.totalorder %s22, 0
      %p64 = por %p62, %p63
      %p65 = scmp.ne.s32.totalorder %s53, %s54
      %p66 = scmp.eq.s32.totalorder %s23, 1
      %p67 = por %p65, %p66
      %p69 = scmp.ne.s32.totalorder %s54, %s68
      %p70 = scmp.eq.s32.totalorder %s23, 0
      %p71 = por %p69, %p70
      %s73 = sadd.s32 %s72, 1
      %p76 = scmp.eq.s32.totalorder %s17, 1
      %p77 = scmp.ne.s32.totalorder %s72, %s74
      %p78 = scmp.eq.s32.totalorder %s17, 0
      %p79 = por %p77, %p78
      %p80 = scmp.ne.s32.totalorder %s72, %s74
      %p81 = scmp.eq.s32.totalorder %s22, 1
      %p82 = por %p80, %p81
      %p83 = scmp.ne.s32.totalorder %s74, %s75
      %p84 = scmp.eq.s32.totalorder %s22, 0
      %p85 = por %p83, %p84
      %p86 = scmp.ne.s32.totalorder %s74, %s75
      %p87 = scmp.eq.s32.totalorder %s23, 1
      %p88 = por %p86, %p87
      %p90 = scmp.ne.s32.totalorder %s75, %s89
      %p91 = scmp.eq.s32.totalorder %s23, 0
      %p92 = por %p90, %p91
      %s94 = sadd.s32 %s93, 1
      %p97 = scmp.eq.s32.totalorder %s17, 1
      %p98 = scmp.ne.s32.totalorder %s93, %s95
      %p99 = scmp.eq.s32.totalorder %s17, 0
      %p100 = por %p98, %p99
      %p101 = scmp.ne.s32.totalorder %s93, %s95
      %p102 = scmp.eq.s32.totalorder %s22, 1
      %p103 = por %p101, %p102
      %p104 = scmp.ne.s32.totalorder %s95, %s96
      %p105 = scmp.eq.s32.totalorder %s22, 0
      %p106 = por %p104, %p105
      %p107 = scmp.ne.s32.totalorder %s95, %s96
      %p108 = scmp.eq.s32.totalorder %s23, 1
      %p109 = por %p107, %p108
      %p111 = scmp.ne.s32.totalorder %s96, %s110
      %p112 = scmp.eq.s32.totalorder %s23, 0
      %p113 = por %p111, %p112
      %s114 = ssub.s32 %s17, %s24
      %p115 = scmp.eq.s32.totalorder %s114, 0
      %s117 = sadd.s32 %s116, 1
      %s118 = scalar_select %p115, %s116, %s117
      %p121 = pneg %p115
      %p122 = scmp.eq.s32.totalorder %s17, 1
      %p123 = por %p121, %p122
      %p124 = scmp.ne.s32.totalorder %s116, %s119
      %p125 = scmp.eq.s32.totalorder %s17, 0
      %p126 = por %p124, %p125
      %p127 = scmp.ne.s32.totalorder %s116, %s119
      %p128 = scmp.eq.s32.totalorder %s22, 1
      %p129 = por %p127, %p128
      %p130 = scmp.ne.s32.totalorder %s119, %s120
      %p131 = scmp.eq.s32.totalorder %s22, 0
      %p132 = por %p130, %p131
      %p133 = scmp.ne.s32.totalorder %s119, %s120
      %p134 = scmp.eq.s32.totalorder %s23, 1
      %p135 = por %p133, %p134
      %p137 = scmp.ne.s32.totalorder %s120, %s136
      %p138 = scmp.eq.s32.totalorder %s23, 0
      %p139 = por %p137, %p138
      %p140 = scmp.le.s32.totalorder 1, %s17
      %p141 = scmp.lt.s32.totalorder %s17, 3
      %p142 = pnand %p140, %p141
      %p143 = pneg %p142
      // Predicated region
      $region9: #{tpu_custom_call.1} parent=5 // pred_check
        _
      $region10: #{tpu_custom_call.1} parent=5 // pred_check_branch
        %145 = sbr.rel (%p142) target = $region12
      $region11: #{tpu_custom_call.1} parent=5 // pred_region
        %s146 = ssub.s32 %s17, 1
        // Predicated region
        $region13: #{tpu_custom_call.1} parent=11 // pred_check
          %p147 = pneg %p64
        $region14: #{tpu_custom_call.1} parent=11 // pred_check_branch
          %149 = sbr.rel (%p147) target = $region16
        $region15: #{tpu_custom_call.1} parent=11 // pred_region
          %151 = vsyncadd [#allocation6], 0
          %s152 = sshll.u32 %s1, 4
          %s153 = int_to_ptr.hbm [resolvable:$true] %s152
          %s154 = sshll.u32 [#allocation5], 4
          %s155 = int_to_ptr.vmem [resolvable:$true] %s154
          %160 = dma.hbm_to_vmem [thread:$0]  %s153, 512, %s155, [#allocation6], 128, 128, 8
        $region16: #{tpu_custom_call.1} parent=11 // pred_fallthru
          _
        // Predicated region
        $region17: #{tpu_custom_call.1} parent=11 // pred_check
          %p161 = pneg %p85
        $region18: #{tpu_custom_call.1} parent=11 // pred_check_branch
          %163 = sbr.rel (%p161) target = $region20
        $region19: #{tpu_custom_call.1} parent=11 // pred_region
          _
        $region20: #{tpu_custom_call.1} parent=11 // pred_fallthru
          _
        // Predicated region
        $region21: #{tpu_custom_call.1} parent=11 // pred_check
          %p164 = pneg %p106
        $region22: #{tpu_custom_call.1} parent=11 // pred_check_branch
          %166 = sbr.rel (%p164) target = $region24
        $region23: #{tpu_custom_call.1} parent=11 // pred_region
          _
        $region24: #{tpu_custom_call.1} parent=11 // pred_fallthru
          _
      $region12: #{tpu_custom_call.1} parent=5 // pred_fallthru
        _
      %p167 = scmp.lt.s32.totalorder %s17, 2
      // Predicated region
      $region25: #{tpu_custom_call.1} parent=5 // pred_check
        %p168 = pneg %p167
      $region26: #{tpu_custom_call.1} parent=5 // pred_check_branch
        %170 = sbr.rel (%p168) target = $region28
      $region27: #{tpu_custom_call.1} parent=5 // pred_region
        // Predicated region
        $region29: #{tpu_custom_call.1} parent=27 // pred_check
          %p171 = pneg %p37
        $region30: #{tpu_custom_call.1} parent=27 // pred_check_branch
          %173 = sbr.rel (%p171) target = $region32
        $region31: #{tpu_custom_call.1} parent=27 // pred_region
          %s174 = sand.u32 %s27, 1
          %s175 = scalar_lea.sflag [#allocation3], %s174
          %s176 = sand.u32 %s27, 1
          %s177 = smul.addr %s176, 64
          %s178 = scalar_lea.vmem [#allocation2], %s177
          %s179 = smul.u32 8, %s17
          %181 = vsyncadd %s175, 0
          %s182 = smul.addr %s179, 8
          %s183 = scalar_lea.hbm %s0, %s182
          %s184 = sshll.u32 %s183, 4
          %s185 = int_to_ptr.hbm [resolvable:$true] %s184
          %s186 = sshll.u32 %s178, 4
          %s187 = int_to_ptr.vmem [resolvable:$true] %s186
          %192 = dma.hbm_to_vmem [thread:$0]  %s185, 1024, %s187, %s175, 128, 128, 8
        $region32: #{tpu_custom_call.1} parent=27 // pred_fallthru
          _
      $region28: #{tpu_custom_call.1} parent=5 // pred_fallthru
        _
      %p193 = scmp.le.s32.totalorder 1, %s17
      %p194 = scmp.lt.s32.totalorder %s17, 3
      %p195 = pnand %p193, %p194
      %p196 = pneg %p195
      // Predicated region
      $region33: #{tpu_custom_call.1} parent=5 // pred_check
        _
      $region34: #{tpu_custom_call.1} parent=5 // pred_check_branch
        %198 = sbr.rel (%p195) target = $region36
      $region35: #{tpu_custom_call.1} parent=5 // pred_region
        %s199 = ssub.s32 %s17, 1
        %s200 = sand.u32 %s30, 1
        %s201 = scalar_lea.sflag [#allocation3], %s200
        %s202 = sand.u32 %s30, 1
        %s203 = smul.addr %s202, 64
        %s204 = scalar_lea.vmem [#allocation2], %s203
        // Predicated region
        $region37: #{tpu_custom_call.1} parent=35 // pred_check
          %p205 = pneg %p43
        $region38: #{tpu_custom_call.1} parent=35 // pred_check_branch
          %207 = sbr.rel (%p205) target = $region40
        $region39: #{tpu_custom_call.1} parent=35 // pred_region
          %209 = dma.done %s201, 1024
        $region40: #{tpu_custom_call.1} parent=35 // pred_fallthru
          _
        // Predicated region
        $region41: #{tpu_custom_call.1} parent=35 // pred_check
          %p210 = pneg %p64
        $region42: #{tpu_custom_call.1} parent=35 // pred_check_branch
          %212 = sbr.rel (%p210) target = $region44
        $region43: #{tpu_custom_call.1} parent=35 // pred_region
          %214 = dma.done [#allocation6], 512
        $region44: #{tpu_custom_call.1} parent=35 // pred_fallthru
          _
        %s215 = sand.u32 %s30, 1
        %s216 = scalar_lea.sflag [#allocation3], %s215
        %s217 = sand.u32 %s30, 1
        %s218 = smul.addr %s217, 64
        %s219 = scalar_lea.vmem [#allocation2], %s218
        %p220 = pneg %p43
        %p221 = pneg %p40
        %p222 = pneg %p64
        %p223 = pneg %p61
        %p224 = pneg %p85
        %p225 = pneg %p82
        %p226 = pneg %p106
        %p227 = pneg %p103
        %p228 = pneg %p132
        %p229 = pneg %p129
        %s230 = sand.u32 %s119, 1
        %s231 = scalar_lea.sflag [#allocation4], %s230
        %s232 = sand.u32 %s119, 1
        %s233 = smul.addr %s232, 128
        %s234 = scalar_lea.vmem [#allocation7], %s233
        %s235 = smul.u32 8, %s22
        %s236 = smul.u32 16, %s22
        %v237 = vld [vmem:[%s204] sm:$0xff]
        %v238 = vld [vmem:[%s204 + $0x8] sm:$0xff]
        %v239 = vld [vmem:[%s204 + $0x10] sm:$0xff]
        %v240 = vld [vmem:[%s204 + $0x18] sm:$0xff]
        %v241 = vld [vmem:[%s204 + $0x20] sm:$0xff]
        %v242 = vld [vmem:[%s204 + $0x28] sm:$0xff]
        %v243 = vld [vmem:[%s204 + $0x30] sm:$0xff]
        %v244 = vld [vmem:[%s204 + $0x38] sm:$0xff]
        %v245 = vld [vmem:[#allocation5] sm:$0xff]
        %v246 = vld [vmem:[#allocation5 + $0x8] sm:$0xff]
        %v247 = vld [vmem:[#allocation5 + $0x10] sm:$0xff]
        %v248 = vld [vmem:[#allocation5 + $0x18] sm:$0xff]
        %vm249 = vcmask 261120
        %v251 = vsel %vm249, %v237, 0
        %v254 = vsel %vm249, %v238, 0
        %v257 = vsel %vm249, %v239, 0
        %v260 = vsel %vm249, %v240, 0
        %v263 = vsel %vm249, %v241, 0
        %v266 = vsel %vm249, %v242, 0
        %v269 = vsel %vm249, %v243, 0
        %v272 = vsel %vm249, %v244, 0
        %274 = vmatpush.msra.mxu0 0.0
        %275 = vmatpush.msra.mxu0 0.0
        %276 = vmatpush.msra.mxu0 0.0
        %277 = vmatpush.msra.mxu0 0.0
        %278 = vmatpush.msra.mxu0 0.0
        %279 = vmatpush.msra.mxu0 0.0
        %280 = vmatpush.msra.mxu0 0.0
        %281 = vmatpush.msra.mxu0 0.0
        %282 = vmatpush.msra.mxu0 0.0
        %283 = vmatpush.msra.mxu0 0.0
        %284 = vmatpush.msra.mxu0 0.0
        %285 = vmatpush.msra.mxu0 0.0
        %286 = vmatpush.msra.mxu0 %v248
        %287 = vmatpush.msra.mxu0 %v247
        %288 = vmatpush.msra.mxu0 %v246
        %289 = vmatpush.msra.mxu0 %v245
        %290 = vmatmul.f32.gmra.mxu0 %v251
        %v291 = vpop.f32.mrf.mxu0
        %v292 = vadd.f32 0.0, %v291
        %293 = vmatmul.f32.gmra.mxu0 %v254
        %v294 = vpop.f32.mrf.mxu0
        %v295 = vadd.f32 0.0, %v294
        %296 = vmatmul.f32.gmra.mxu0 %v257
        %v297 = vpop.f32.mrf.mxu0
        %v298 = vadd.f32 0.0, %v297
        %299 = vmatmul.f32.gmra.mxu0 %v260
        %v300 = vpop.f32.mrf.mxu0
        %v301 = vadd.f32 0.0, %v300
        %302 = vmatmul.f32.gmra.mxu0 %v263
        %v303 = vpop.f32.mrf.mxu0
        %v304 = vadd.f32 0.0, %v303
        %305 = vmatmul.f32.gmra.mxu0 %v266
        %v306 = vpop.f32.mrf.mxu0
        %v307 = vadd.f32 0.0, %v306
        %308 = vmatmul.f32.gmra.mxu0 %v269
        %v309 = vpop.f32.mrf.mxu0
        %v310 = vadd.f32 0.0, %v309
        %311 = vmatmul.f32.gmra.mxu0 %v272
        %v312 = vpop.f32.mrf.mxu0
        %v313 = vadd.f32 0.0, %v312
        %314 = vdwg.mxu0
        %vm315 = vcmask 130048
        %v316 = vsel %vm315, %v292, 0.0
        %317 = vadd.xlane.f32.xlu0 %v316
        %v318 = vpop.xlane.xlu0 %317
        %v319 = vsel %vm315, %v295, 0.0
        %320 = vadd.xlane.f32.xlu0 %v319
        %v321 = vpop.xlane.xlu0 %320
        %v322 = vsel %vm315, %v298, 0.0
        %323 = vadd.xlane.f32.xlu0 %v322
        %v324 = vpop.xlane.xlu0 %323
        %v325 = vsel %vm315, %v301, 0.0
        %326 = vadd.xlane.f32.xlu0 %v325
        %v327 = vpop.xlane.xlu0 %326
        %v328 = vsel %vm315, %v304, 0.0
        %329 = vadd.xlane.f32.xlu0 %v328
        %v330 = vpop.xlane.xlu0 %329
        %v331 = vsel %vm315, %v307, 0.0
        %332 = vadd.xlane.f32.xlu0 %v331
        %v333 = vpop.xlane.xlu0 %332
        %v334 = vsel %vm315, %v310, 0.0
        %335 = vadd.xlane.f32.xlu0 %v334
        %v336 = vpop.xlane.xlu0 %335
        %v337 = vsel %vm315, %v313, 0.0
        %338 = vadd.xlane.f32.xlu0 %v337
        %v339 = vpop.xlane.xlu0 %338
        %v340 = vrcp.pop 16.0
        %v341 = vmul.f32 16.0, %v340
        %v342 = vsub.f32 1.0, %v341
        %v343 = vmul.f32 %v340, %v342
        %v344 = vadd.f32 %v340, %v343
        %vm345 = vweird.f32 %v340
        %v346 = vsel %vm345, %v340, %v344
        %v347 = vmul.f32 %v318, %v346
        %v348 = vmul.f32 %v321, %v346
        %v349 = vmul.f32 %v324, %v346
        %v350 = vmul.f32 %v327, %v346
        %v351 = vmul.f32 %v330, %v346
        %v352 = vmul.f32 %v333, %v346
        %v353 = vmul.f32 %v336, %v346
        %v354 = vmul.f32 %v339, %v346
        %v355 = vsub.f32 %v292, %v347
        %v356 = vsub.f32 %v295, %v348
        %v357 = vsub.f32 %v298, %v349
        %v358 = vsub.f32 %v301, %v350
        %v359 = vsub.f32 %v304, %v351
        %v360 = vsub.f32 %v307, %v352
        %v361 = vsub.f32 %v310, %v353
        %v362 = vsub.f32 %v313, %v354
        %v363 = vmul.f32 %v355, %v355
        %v364 = vmul.f32 %v356, %v356
        %v365 = vmul.f32 %v357, %v357
        %v366 = vmul.f32 %v358, %v358
        %v367 = vmul.f32 %v359, %v359
        %v368 = vmul.f32 %v360, %v360
        %v369 = vmul.f32 %v361, %v361
        %v370 = vmul.f32 %v362, %v362
        %v371 = vsel %vm315, %v363, 0.0
        %372 = vadd.xlane.f32.xlu0 %v371
        %v373 = vpop.xlane.xlu0 %372
        %v374 = vsel %vm315, %v364, 0.0
        %375 = vadd.xlane.f32.xlu0 %v374
        %v376 = vpop.xlane.xlu0 %375
        %v377 = vsel %vm315, %v365, 0.0
        %378 = vadd.xlane.f32.xlu0 %v377
        %v379 = vpop.xlane.xlu0 %378
        %v380 = vsel %vm315, %v366, 0.0
        %381 = vadd.xlane.f32.xlu0 %v380
        %v382 = vpop.xlane.xlu0 %381
        %v383 = vsel %vm315, %v367, 0.0
        %384 = vadd.xlane.f32.xlu0 %v383
        %v385 = vpop.xlane.xlu0 %384
        %v386 = vsel %vm315, %v368, 0.0
        %387 = vadd.xlane.f32.xlu0 %v386
        %v388 = vpop.xlane.xlu0 %387
        %v389 = vsel %vm315, %v369, 0.0
        %390 = vadd.xlane.f32.xlu0 %v389
        %v391 = vpop.xlane.xlu0 %390
        %v392 = vsel %vm315, %v370, 0.0
        %393 = vadd.xlane.f32.xlu0 %v392
        %v394 = vpop.xlane.xlu0 %393
        %v395 = vmul.f32 %v373, %v346
        %v396 = vmul.f32 %v376, %v346
        %v397 = vmul.f32 %v379, %v346
        %v398 = vmul.f32 %v382, %v346
        %v399 = vmul.f32 %v385, %v346
        %v400 = vmul.f32 %v388, %v346
        %v401 = vmul.f32 %v391, %v346
        %v402 = vmul.f32 %v394, %v346
        %v403 = vadd.f32 %v395, 1e-05
        %v404 = vadd.f32 %v396, 1e-05
        %v405 = vadd.f32 %v397, 1e-05
        %v406 = vadd.f32 %v398, 1e-05
        %v407 = vadd.f32 %v399, 1e-05
        %v408 = vadd.f32 %v400, 1e-05
        %v409 = vadd.f32 %v401, 1e-05
        %v410 = vadd.f32 %v402, 1e-05
        %v411 = vrsqrt.pop %v403
        %v412 = vmul.f32 %v411, %v403
        %v413 = vmul.f32 %v412, %v411
        %v414 = vmul.f32 0.5, %v413
        %v415 = vsub.f32 1.5, %v414
        %v416 = vmul.f32 %v411, %v415
        %vm417 = vweird.f32 %v403
        %vm418 = vweird.f32 %v411
        %vm419 = vmor %vm417, %vm418
        %v420 = vsel %vm419, %v411, %v416
        %v421 = vrsqrt.pop %v404
        %v422 = vmul.f32 %v421, %v404
        %v423 = vmul.f32 %v422, %v421
        %v424 = vmul.f32 0.5, %v423
        %v425 = vsub.f32 1.5, %v424
        %v426 = vmul.f32 %v421, %v425
        %vm427 = vweird.f32 %v404
        %vm428 = vweird.f32 %v421
        %vm429 = vmor %vm427, %vm428
        %v430 = vsel %vm429, %v421, %v426
        %v431 = vrsqrt.pop %v405
        %v432 = vmul.f32 %v431, %v405
        %v433 = vmul.f32 %v432, %v431
        %v434 = vmul.f32 0.5, %v433
        %v435 = vsub.f32 1.5, %v434
        %v436 = vmul.f32 %v431, %v435
        %vm437 = vweird.f32 %v405
        %vm438 = vweird.f32 %v431
        %vm439 = vmor %vm437, %vm438
        %v440 = vsel %vm439, %v431, %v436
        %v441 = vrsqrt.pop %v406
        %v442 = vmul.f32 %v441, %v406
        %v443 = vmul.f32 %v442, %v441
        %v444 = vmul.f32 0.5, %v443
        %v445 = vsub.f32 1.5, %v444
        %v446 = vmul.f32 %v441, %v445
        %vm447 = vweird.f32 %v406
        %vm448 = vweird.f32 %v441
        %vm449 = vmor %vm447, %vm448
        %v450 = vsel %vm449, %v441, %v446
        %v451 = vrsqrt.pop %v407
        %v452 = vmul.f32 %v451, %v407
        %v453 = vmul.f32 %v452, %v451
        %v454 = vmul.f32 0.5, %v453
        %v455 = vsub.f32 1.5, %v454
        %v456 = vmul.f32 %v451, %v455
        %vm457 = vweird.f32 %v407
        %vm458 = vweird.f32 %v451
        %vm459 = vmor %vm457, %vm458
        %v460 = vsel %vm459, %v451, %v456
        %v461 = vrsqrt.pop %v408
        %v462 = vmul.f32 %v461, %v408
        %v463 = vmul.f32 %v462, %v461
        %v464 = vmul.f32 0.5, %v463
        %v465 = vsub.f32 1.5, %v464
        %v466 = vmul.f32 %v461, %v465
        %vm467 = vweird.f32 %v408
        %vm468 = vweird.f32 %v461
        %vm469 = vmor %vm467, %vm468
        %v470 = vsel %vm469, %v461, %v466
        %v471 = vrsqrt.pop %v409
        %v472 = vmul.f32 %v471, %v409
        %v473 = vmul.f32 %v472, %v471
        %v474 = vmul.f32 0.5, %v473
        %v475 = vsub.f32 1.5, %v474
        %v476 = vmul.f32 %v471, %v475
        %vm477 = vweird.f32 %v409
        %vm478 = vweird.f32 %v471
        %vm479 = vmor %vm477, %vm478
        %v480 = vsel %vm479, %v471, %v476
        %v481 = vrsqrt.pop %v410
        %v482 = vmul.f32 %v481, %v410
        %v483 = vmul.f32 %v482, %v481
        %v484 = vmul.f32 0.5, %v483
        %v485 = vsub.f32 1.5, %v484
        %v486 = vmul.f32 %v481, %v485
        %vm487 = vweird.f32 %v410
        %vm488 = vweird.f32 %v481
        %vm489 = vmor %vm487, %vm488
        %v490 = vsel %vm489, %v481, %v486
        %v491 = vmul.f32 %v355, %v420
        %v492 = vmul.f32 %v356, %v430
        %v493 = vmul.f32 %v357, %v440
        %v494 = vmul.f32 %v358, %v450
        %v495 = vmul.f32 %v359, %v460
        %v496 = vmul.f32 %v360, %v470
        %v497 = vmul.f32 %v361, %v480
        %v498 = vmul.f32 %v362, %v490
        %507 = vrot.lane.b32.xlu0 %v292, 112
        %v508 = vpop.permute.xlu0 %507
        %509 = vrot.lane.b32.xlu0 %v295, 112
        %v510 = vpop.permute.xlu0 %509
        %511 = vrot.lane.b32.xlu0 %v298, 112
        %v512 = vpop.permute.xlu0 %511
        %513 = vrot.lane.b32.xlu0 %v301, 112
        %v514 = vpop.permute.xlu0 %513
        %515 = vrot.lane.b32.xlu0 %v304, 112
        %v516 = vpop.permute.xlu0 %515
        %517 = vrot.lane.b32.xlu0 %v307, 112
        %v518 = vpop.permute.xlu0 %517
        %519 = vrot.lane.b32.xlu0 %v310, 112
        %v520 = vpop.permute.xlu0 %519
        %521 = vrot.lane.b32.xlu0 %v313, 112
        %v522 = vpop.permute.xlu0 %521
        %v531 = vsel %vm315, %v508, 0.0
        %532 = vadd.xlane.f32.xlu0 %v531
        %v533 = vpop.xlane.xlu0 %532
        %v534 = vsel %vm315, %v510, 0.0
        %535 = vadd.xlane.f32.xlu0 %v534
        %v536 = vpop.xlane.xlu0 %535
        %v537 = vsel %vm315, %v512, 0.0
        %538 = vadd.xlane.f32.xlu0 %v537
        %v539 = vpop.xlane.xlu0 %538
        %v540 = vsel %vm315, %v514, 0.0
        %541 = vadd.xlane.f32.xlu0 %v540
        %v542 = vpop.xlane.xlu0 %541
        %v543 = vsel %vm315, %v516, 0.0
        %544 = vadd.xlane.f32.xlu0 %v543
        %v545 = vpop.xlane.xlu0 %544
        %v546 = vsel %vm315, %v518, 0.0
        %547 = vadd.xlane.f32.xlu0 %v546
        %v548 = vpop.xlane.xlu0 %547
        %v549 = vsel %vm315, %v520, 0.0
        %550 = vadd.xlane.f32.xlu0 %v549
        %v551 = vpop.xlane.xlu0 %550
        %v552 = vsel %vm315, %v522, 0.0
        %553 = vadd.xlane.f32.xlu0 %v552
        %v554 = vpop.xlane.xlu0 %553
        %v555 = vmul.f32 %v533, %v346
        %v556 = vmul.f32 %v536, %v346
        %v557 = vmul.f32 %v539, %v346
        %v558 = vmul.f32 %v542, %v346
        %v559 = vmul.f32 %v545, %v346
        %v560 = vmul.f32 %v548, %v346
        %v561 = vmul.f32 %v551, %v346
        %v562 = vmul.f32 %v554, %v346
        %v563 = vsub.f32 %v292, %v555
        %v564 = vsub.f32 %v295, %v556
        %v565 = vsub.f32 %v298, %v557
        %v566 = vsub.f32 %v301, %v558
        %v567 = vsub.f32 %v304, %v559
        %v568 = vsub.f32 %v307, %v560
        %v569 = vsub.f32 %v310, %v561
        %v570 = vsub.f32 %v313, %v562
        %v571 = vmul.f32 %v563, %v563
        %v572 = vmul.f32 %v564, %v564
        %v573 = vmul.f32 %v565, %v565
        %v574 = vmul.f32 %v566, %v566
        %v575 = vmul.f32 %v567, %v567
        %v576 = vmul.f32 %v568, %v568
        %v577 = vmul.f32 %v569, %v569
        %v578 = vmul.f32 %v570, %v570
        %587 = vrot.lane.b32.xlu0 %v571, 112
        %v588 = vpop.permute.xlu0 %587
        %589 = vrot.lane.b32.xlu0 %v572, 112
        %v590 = vpop.permute.xlu0 %589
        %591 = vrot.lane.b32.xlu0 %v573, 112
        %v592 = vpop.permute.xlu0 %591
        %593 = vrot.lane.b32.xlu0 %v574, 112
        %v594 = vpop.permute.xlu0 %593
        %595 = vrot.lane.b32.xlu0 %v575, 112
        %v596 = vpop.permute.xlu0 %595
        %597 = vrot.lane.b32.xlu0 %v576, 112
        %v598 = vpop.permute.xlu0 %597
        %599 = vrot.lane.b32.xlu0 %v577, 112
        %v600 = vpop.permute.xlu0 %599
        %601 = vrot.lane.b32.xlu0 %v578, 112
        %v602 = vpop.permute.xlu0 %601
        %v611 = vsel %vm315, %v588, 0.0
        %612 = vadd.xlane.f32.xlu0 %v611
        %v613 = vpop.xlane.xlu0 %612
        %v614 = vsel %vm315, %v590, 0.0
        %615 = vadd.xlane.f32.xlu0 %v614
        %v616 = vpop.xlane.xlu0 %615
        %v617 = vsel %vm315, %v592, 0.0
        %618 = vadd.xlane.f32.xlu0 %v617
        %v619 = vpop.xlane.xlu0 %618
        %v620 = vsel %vm315, %v594, 0.0
        %621 = vadd.xlane.f32.xlu0 %v620
        %v622 = vpop.xlane.xlu0 %621
        %v623 = vsel %vm315, %v596, 0.0
        %624 = vadd.xlane.f32.xlu0 %v623
        %v625 = vpop.xlane.xlu0 %624
        %v626 = vsel %vm315, %v598, 0.0
        %627 = vadd.xlane.f32.xlu0 %v626
        %v628 = vpop.xlane.xlu0 %627
        %v629 = vsel %vm315, %v600, 0.0
        %630 = vadd.xlane.f32.xlu0 %v629
        %v631 = vpop.xlane.xlu0 %630
        %v632 = vsel %vm315, %v602, 0.0
        %633 = vadd.xlane.f32.xlu0 %v632
        %v634 = vpop.xlane.xlu0 %633
        %v635 = vmul.f32 %v613, %v346
        %v636 = vmul.f32 %v616, %v346
        %v637 = vmul.f32 %v619, %v346
        %v638 = vmul.f32 %v622, %v346
        %v639 = vmul.f32 %v625, %v346
        %v640 = vmul.f32 %v628, %v346
        %v641 = vmul.f32 %v631, %v346
        %v642 = vmul.f32 %v634, %v346
        %v643 = vadd.f32 %v635, 1e-05
        %v644 = vadd.f32 %v636, 1e-05
        %v645 = vadd.f32 %v637, 1e-05
        %v646 = vadd.f32 %v638, 1e-05
        %v647 = vadd.f32 %v639, 1e-05
        %v648 = vadd.f32 %v640, 1e-05
        %v649 = vadd.f32 %v641, 1e-05
        %v650 = vadd.f32 %v642, 1e-05
        %v651 = vrsqrt.pop %v643
        %v652 = vmul.f32 %v651, %v643
        %v653 = vmul.f32 %v652, %v651
        %v654 = vmul.f32 0.5, %v653
        %v655 = vsub.f32 1.5, %v654
        %v656 = vmul.f32 %v651, %v655
        %vm657 = vweird.f32 %v643
        %vm658 = vweird.f32 %v651
        %vm659 = vmor %vm657, %vm658
        %v660 = vsel %vm659, %v651, %v656
        %v661 = vrsqrt.pop %v644
        %v662 = vmul.f32 %v661, %v644
        %v663 = vmul.f32 %v662, %v661
        %v664 = vmul.f32 0.5, %v663
        %v665 = vsub.f32 1.5, %v664
        %v666 = vmul.f32 %v661, %v665
        %vm667 = vweird.f32 %v644
        %vm668 = vweird.f32 %v661
        %vm669 = vmor %vm667, %vm668
        %v670 = vsel %vm669, %v661, %v666
        %v671 = vrsqrt.pop %v645
        %v672 = vmul.f32 %v671, %v645
        %v673 = vmul.f32 %v672, %v671
        %v674 = vmul.f32 0.5, %v673
        %v675 = vsub.f32 1.5, %v674
        %v676 = vmul.f32 %v671, %v675
        %vm677 = vweird.f32 %v645
        %vm678 = vweird.f32 %v671
        %vm679 = vmor %vm677, %vm678
        %v680 = vsel %vm679, %v671, %v676
        %v681 = vrsqrt.pop %v646
        %v682 = vmul.f32 %v681, %v646
        %v683 = vmul.f32 %v682, %v681
        %v684 = vmul.f32 0.5, %v683
        %v685 = vsub.f32 1.5, %v684
        %v686 = vmul.f32 %v681, %v685
        %vm687 = vweird.f32 %v646
        %vm688 = vweird.f32 %v681
        %vm689 = vmor %vm687, %vm688
        %v690 = vsel %vm689, %v681, %v686
        %v691 = vrsqrt.pop %v647
        %v692 = vmul.f32 %v691, %v647
        %v693 = vmul.f32 %v692, %v691
        %v694 = vmul.f32 0.5, %v693
        %v695 = vsub.f32 1.5, %v694
        %v696 = vmul.f32 %v691, %v695
        %vm697 = vweird.f32 %v647
        %vm698 = vweird.f32 %v691
        %vm699 = vmor %vm697, %vm698
        %v700 = vsel %vm699, %v691, %v696
        %v701 = vrsqrt.pop %v648
        %v702 = vmul.f32 %v701, %v648
        %v703 = vmul.f32 %v702, %v701
        %v704 = vmul.f32 0.5, %v703
        %v705 = vsub.f32 1.5, %v704
        %v706 = vmul.f32 %v701, %v705
        %vm707 = vweird.f32 %v648
        %vm708 = vweird.f32 %v701
        %vm709 = vmor %vm707, %vm708
        %v710 = vsel %vm709, %v701, %v706
        %v711 = vrsqrt.pop %v649
        %v712 = vmul.f32 %v711, %v649
        %v713 = vmul.f32 %v712, %v711
        %v714 = vmul.f32 0.5, %v713
        %v715 = vsub.f32 1.5, %v714
        %v716 = vmul.f32 %v711, %v715
        %vm717 = vweird.f32 %v649
        %vm718 = vweird.f32 %v711
        %vm719 = vmor %vm717, %vm718
        %v720 = vsel %vm719, %v711, %v716
        %v721 = vrsqrt.pop %v650
        %v722 = vmul.f32 %v721, %v650
        %v723 = vmul.f32 %v722, %v721
        %v724 = vmul.f32 0.5, %v723
        %v725 = vsub.f32 1.5, %v724
        %v726 = vmul.f32 %v721, %v725
        %vm727 = vweird.f32 %v650
        %vm728 = vweird.f32 %v721
        %vm729 = vmor %vm727, %vm728
        %v730 = vsel %vm729, %v721, %v726
        %v731 = vmul.f32 %v563, %v660
        %v732 = vmul.f32 %v564, %v670
        %v733 = vmul.f32 %v565, %v680
        %v734 = vmul.f32 %v566, %v690
        %v735 = vmul.f32 %v567, %v700
        %v736 = vmul.f32 %v568, %v710
        %v737 = vmul.f32 %v569, %v720
        %v738 = vmul.f32 %v570, %v730
        %739 = vrot.lane.b32.xlu0 %v292, 96
        %v740 = vpop.permute.xlu0 %739
        %741 = vrot.lane.b32.xlu0 %v295, 96
        %v742 = vpop.permute.xlu0 %741
        %743 = vrot.lane.b32.xlu0 %v298, 96
        %v744 = vpop.permute.xlu0 %743
        %745 = vrot.lane.b32.xlu0 %v301, 96
        %v746 = vpop.permute.xlu0 %745
        %747 = vrot.lane.b32.xlu0 %v304, 96
        %v748 = vpop.permute.xlu0 %747
        %749 = vrot.lane.b32.xlu0 %v307, 96
        %v750 = vpop.permute.xlu0 %749
        %751 = vrot.lane.b32.xlu0 %v310, 96
        %v752 = vpop.permute.xlu0 %751
        %753 = vrot.lane.b32.xlu0 %v313, 96
        %v754 = vpop.permute.xlu0 %753
        %v763 = vsel %vm315, %v740, 0.0
        %764 = vadd.xlane.f32.xlu0 %v763
        %v765 = vpop.xlane.xlu0 %764
        %v766 = vsel %vm315, %v742, 0.0
        %767 = vadd.xlane.f32.xlu0 %v766
        %v768 = vpop.xlane.xlu0 %767
        %v769 = vsel %vm315, %v744, 0.0
        %770 = vadd.xlane.f32.xlu0 %v769
        %v771 = vpop.xlane.xlu0 %770
        %v772 = vsel %vm315, %v746, 0.0
        %773 = vadd.xlane.f32.xlu0 %v772
        %v774 = vpop.xlane.xlu0 %773
        %v775 = vsel %vm315, %v748, 0.0
        %776 = vadd.xlane.f32.xlu0 %v775
        %v777 = vpop.xlane.xlu0 %776
        %v778 = vsel %vm315, %v750, 0.0
        %779 = vadd.xlane.f32.xlu0 %v778
        %v780 = vpop.xlane.xlu0 %779
        %v781 = vsel %vm315, %v752, 0.0
        %782 = vadd.xlane.f32.xlu0 %v781
        %v783 = vpop.xlane.xlu0 %782
        %v784 = vsel %vm315, %v754, 0.0
        %785 = vadd.xlane.f32.xlu0 %v784
        %v786 = vpop.xlane.xlu0 %785
        %v787 = vmul.f32 %v765, %v346
        %v788 = vmul.f32 %v768, %v346
        %v789 = vmul.f32 %v771, %v346
        %v790 = vmul.f32 %v774, %v346
        %v791 = vmul.f32 %v777, %v346
        %v792 = vmul.f32 %v780, %v346
        %v793 = vmul.f32 %v783, %v346
        %v794 = vmul.f32 %v786, %v346
        %v795 = vsub.f32 %v292, %v787
        %v796 = vsub.f32 %v295, %v788
        %v797 = vsub.f32 %v298, %v789
        %v798 = vsub.f32 %v301, %v790
        %v799 = vsub.f32 %v304, %v791
        %v800 = vsub.f32 %v307, %v792
        %v801 = vsub.f32 %v310, %v793
        %v802 = vsub.f32 %v313, %v794
        %v803 = vmul.f32 %v795, %v795
        %v804 = vmul.f32 %v796, %v796
        %v805 = vmul.f32 %v797, %v797
        %v806 = vmul.f32 %v798, %v798
        %v807 = vmul.f32 %v799, %v799
        %v808 = vmul.f32 %v800, %v800
        %v809 = vmul.f32 %v801, %v801
        %v810 = vmul.f32 %v802, %v802
        %819 = vrot.lane.b32.xlu0 %v803, 96
        %v820 = vpop.permute.xlu0 %819
        %821 = vrot.lane.b32.xlu0 %v804, 96
        %v822 = vpop.permute.xlu0 %821
        %823 = vrot.lane.b32.xlu0 %v805, 96
        %v824 = vpop.permute.xlu0 %823
        %825 = vrot.lane.b32.xlu0 %v806, 96
        %v826 = vpop.permute.xlu0 %825
        %827 = vrot.lane.b32.xlu0 %v807, 96
        %v828 = vpop.permute.xlu0 %827
        %829 = vrot.lane.b32.xlu0 %v808, 96
        %v830 = vpop.permute.xlu0 %829
        %831 = vrot.lane.b32.xlu0 %v809, 96
        %v832 = vpop.permute.xlu0 %831
        %833 = vrot.lane.b32.xlu0 %v810, 96
        %v834 = vpop.permute.xlu0 %833
        %v843 = vsel %vm315, %v820, 0.0
        %844 = vadd.xlane.f32.xlu0 %v843
        %v845 = vpop.xlane.xlu0 %844
        %v846 = vsel %vm315, %v822, 0.0
        %847 = vadd.xlane.f32.xlu0 %v846
        %v848 = vpop.xlane.xlu0 %847
        %v849 = vsel %vm315, %v824, 0.0
        %850 = vadd.xlane.f32.xlu0 %v849
        %v851 = vpop.xlane.xlu0 %850
        %v852 = vsel %vm315, %v826, 0.0
        %853 = vadd.xlane.f32.xlu0 %v852
        %v854 = vpop.xlane.xlu0 %853
        %v855 = vsel %vm315, %v828, 0.0
        %856 = vadd.xlane.f32.xlu0 %v855
        %v857 = vpop.xlane.xlu0 %856
        %v858 = vsel %vm315, %v830, 0.0
        %859 = vadd.xlane.f32.xlu0 %v858
        %v860 = vpop.xlane.xlu0 %859
        %v861 = vsel %vm315, %v832, 0.0
        %862 = vadd.xlane.f32.xlu0 %v861
        %v863 = vpop.xlane.xlu0 %862
        %v864 = vsel %vm315, %v834, 0.0
        %865 = vadd.xlane.f32.xlu0 %v864
        %v866 = vpop.xlane.xlu0 %865
        %v867 = vmul.f32 %v845, %v346
        %v868 = vmul.f32 %v848, %v346
        %v869 = vmul.f32 %v851, %v346
        %v870 = vmul.f32 %v854, %v346
        %v871 = vmul.f32 %v857, %v346
        %v872 = vmul.f32 %v860, %v346
        %v873 = vmul.f32 %v863, %v346
        %v874 = vmul.f32 %v866, %v346
        %v875 = vadd.f32 %v867, 1e-05
        %v876 = vadd.f32 %v868, 1e-05
        %v877 = vadd.f32 %v869, 1e-05
        %v878 = vadd.f32 %v870, 1e-05
        %v879 = vadd.f32 %v871, 1e-05
        %v880 = vadd.f32 %v872, 1e-05
        %v881 = vadd.f32 %v873, 1e-05
        %v882 = vadd.f32 %v874, 1e-05
        %v883 = vrsqrt.pop %v875
        %v884 = vmul.f32 %v883, %v875
        %v885 = vmul.f32 %v884, %v883
        %v886 = vmul.f32 0.5, %v885
        %v887 = vsub.f32 1.5, %v886
        %v888 = vmul.f32 %v883, %v887
        %vm889 = vweird.f32 %v875
        %vm890 = vweird.f32 %v883
        %vm891 = vmor %vm889, %vm890
        %v892 = vsel %vm891, %v883, %v888
        %v893 = vrsqrt.pop %v876
        %v894 = vmul.f32 %v893, %v876
        %v895 = vmul.f32 %v894, %v893
        %v896 = vmul.f32 0.5, %v895
        %v897 = vsub.f32 1.5, %v896
        %v898 = vmul.f32 %v893, %v897
        %vm899 = vweird.f32 %v876
        %vm900 = vweird.f32 %v893
        %vm901 = vmor %vm899, %vm900
        %v902 = vsel %vm901, %v893, %v898
        %v903 = vrsqrt.pop %v877
        %v904 = vmul.f32 %v903, %v877
        %v905 = vmul.f32 %v904, %v903
        %v906 = vmul.f32 0.5, %v905
        %v907 = vsub.f32 1.5, %v906
        %v908 = vmul.f32 %v903, %v907
        %vm909 = vweird.f32 %v877
        %vm910 = vweird.f32 %v903
        %vm911 = vmor %vm909, %vm910
        %v912 = vsel %vm911, %v903, %v908
        %v913 = vrsqrt.pop %v878
        %v914 = vmul.f32 %v913, %v878
        %v915 = vmul.f32 %v914, %v913
        %v916 = vmul.f32 0.5, %v915
        %v917 = vsub.f32 1.5, %v916
        %v918 = vmul.f32 %v913, %v917
        %vm919 = vweird.f32 %v878
        %vm920 = vweird.f32 %v913
        %vm921 = vmor %vm919, %vm920
        %v922 = vsel %vm921, %v913, %v918
        %v923 = vrsqrt.pop %v879
        %v924 = vmul.f32 %v923, %v879
        %v925 = vmul.f32 %v924, %v923
        %v926 = vmul.f32 0.5, %v925
        %v927 = vsub.f32 1.5, %v926
        %v928 = vmul.f32 %v923, %v927
        %vm929 = vweird.f32 %v879
        %vm930 = vweird.f32 %v923
        %vm931 = vmor %vm929, %vm930
        %v932 = vsel %vm931, %v923, %v928
        %v933 = vrsqrt.pop %v880
        %v934 = vmul.f32 %v933, %v880
        %v935 = vmul.f32 %v934, %v933
        %v936 = vmul.f32 0.5, %v935
        %v937 = vsub.f32 1.5, %v936
        %v938 = vmul.f32 %v933, %v937
        %vm939 = vweird.f32 %v880
        %vm940 = vweird.f32 %v933
        %vm941 = vmor %vm939, %vm940
        %v942 = vsel %vm941, %v933, %v938
        %v943 = vrsqrt.pop %v881
        %v944 = vmul.f32 %v943, %v881
        %v945 = vmul.f32 %v944, %v943
        %v946 = vmul.f32 0.5, %v945
        %v947 = vsub.f32 1.5, %v946
        %v948 = vmul.f32 %v943, %v947
        %vm949 = vweird.f32 %v881
        %vm950 = vweird.f32 %v943
        %vm951 = vmor %vm949, %vm950
        %v952 = vsel %vm951, %v943, %v948
        %v953 = vrsqrt.pop %v882
        %v954 = vmul.f32 %v953, %v882
        %v955 = vmul.f32 %v954, %v953
        %v956 = vmul.f32 0.5, %v955
        %v957 = vsub.f32 1.5, %v956
        %v958 = vmul.f32 %v953, %v957
        %vm959 = vweird.f32 %v882
        %vm960 = vweird.f32 %v953
        %vm961 = vmor %vm959, %vm960
        %v962 = vsel %vm961, %v953, %v958
        %v963 = vmul.f32 %v795, %v892
        %v964 = vmul.f32 %v796, %v902
        %v965 = vmul.f32 %v797, %v912
        %v966 = vmul.f32 %v798, %v922
        %v967 = vmul.f32 %v799, %v932
        %v968 = vmul.f32 %v800, %v942
        %v969 = vmul.f32 %v801, %v952
        %v970 = vmul.f32 %v802, %v962
        %971 = vrot.lane.b32.xlu0 %v292, 80
        %v972 = vpop.permute.xlu0 %971
        %973 = vrot.lane.b32.xlu0 %v295, 80
        %v974 = vpop.permute.xlu0 %973
        %975 = vrot.lane.b32.xlu0 %v298, 80
        %v976 = vpop.permute.xlu0 %975
        %977 = vrot.lane.b32.xlu0 %v301, 80
        %v978 = vpop.permute.xlu0 %977
        %979 = vrot.lane.b32.xlu0 %v304, 80
        %v980 = vpop.permute.xlu0 %979
        %981 = vrot.lane.b32.xlu0 %v307, 80
        %v982 = vpop.permute.xlu0 %981
        %983 = vrot.lane.b32.xlu0 %v310, 80
        %v984 = vpop.permute.xlu0 %983
        %985 = vrot.lane.b32.xlu0 %v313, 80
        %v986 = vpop.permute.xlu0 %985
        %v995 = vsel %vm315, %v972, 0.0
        %996 = vadd.xlane.f32.xlu0 %v995
        %v997 = vpop.xlane.xlu0 %996
        %v998 = vsel %vm315, %v974, 0.0
        %999 = vadd.xlane.f32.xlu0 %v998
        %v1000 = vpop.xlane.xlu0 %999
        %v1001 = vsel %vm315, %v976, 0.0
        %1002 = vadd.xlane.f32.xlu0 %v1001
        %v1003 = vpop.xlane.xlu0 %1002
        %v1004 = vsel %vm315, %v978, 0.0
        %1005 = vadd.xlane.f32.xlu0 %v1004
        %v1006 = vpop.xlane.xlu0 %1005
        %v1007 = vsel %vm315, %v980, 0.0
        %1008 = vadd.xlane.f32.xlu0 %v1007
        %v1009 = vpop.xlane.xlu0 %1008
        %v1010 = vsel %vm315, %v982, 0.0
        %1011 = vadd.xlane.f32.xlu0 %v1010
        %v1012 = vpop.xlane.xlu0 %1011
        %v1013 = vsel %vm315, %v984, 0.0
        %1014 = vadd.xlane.f32.xlu0 %v1013
        %v1015 = vpop.xlane.xlu0 %1014
        %v1016 = vsel %vm315, %v986, 0.0
        %1017 = vadd.xlane.f32.xlu0 %v1016
        %v1018 = vpop.xlane.xlu0 %1017
        %v1019 = vmul.f32 %v997, %v346
        %v1020 = vmul.f32 %v1000, %v346
        %v1021 = vmul.f32 %v1003, %v346
        %v1022 = vmul.f32 %v1006, %v346
        %v1023 = vmul.f32 %v1009, %v346
        %v1024 = vmul.f32 %v1012, %v346
        %v1025 = vmul.f32 %v1015, %v346
        %v1026 = vmul.f32 %v1018, %v346
        %v1027 = vsub.f32 %v292, %v1019
        %v1028 = vsub.f32 %v295, %v1020
        %v1029 = vsub.f32 %v298, %v1021
        %v1030 = vsub.f32 %v301, %v1022
        %v1031 = vsub.f32 %v304, %v1023
        %v1032 = vsub.f32 %v307, %v1024
        %v1033 = vsub.f32 %v310, %v1025
        %v1034 = vsub.f32 %v313, %v1026
        %v1035 = vmul.f32 %v1027, %v1027
        %v1036 = vmul.f32 %v1028, %v1028
        %v1037 = vmul.f32 %v1029, %v1029
        %v1038 = vmul.f32 %v1030, %v1030
        %v1039 = vmul.f32 %v1031, %v1031
        %v1040 = vmul.f32 %v1032, %v1032
        %v1041 = vmul.f32 %v1033, %v1033
        %v1042 = vmul.f32 %v1034, %v1034
        %1051 = vrot.lane.b32.xlu0 %v1035, 80
        %v1052 = vpop.permute.xlu0 %1051
        %1053 = vrot.lane.b32.xlu0 %v1036, 80
        %v1054 = vpop.permute.xlu0 %1053
        %1055 = vrot.lane.b32.xlu0 %v1037, 80
        %v1056 = vpop.permute.xlu0 %1055
        %1057 = vrot.lane.b32.xlu0 %v1038, 80
        %v1058 = vpop.permute.xlu0 %1057
        %1059 = vrot.lane.b32.xlu0 %v1039, 80
        %v1060 = vpop.permute.xlu0 %1059
        %1061 = vrot.lane.b32.xlu0 %v1040, 80
        %v1062 = vpop.permute.xlu0 %1061
        %1063 = vrot.lane.b32.xlu0 %v1041, 80
        %v1064 = vpop.permute.xlu0 %1063
        %1065 = vrot.lane.b32.xlu0 %v1042, 80
        %v1066 = vpop.permute.xlu0 %1065
        %v1075 = vsel %vm315, %v1052, 0.0
        %1076 = vadd.xlane.f32.xlu0 %v1075
        %v1077 = vpop.xlane.xlu0 %1076
        %v1078 = vsel %vm315, %v1054, 0.0
        %1079 = vadd.xlane.f32.xlu0 %v1078
        %v1080 = vpop.xlane.xlu0 %1079
        %v1081 = vsel %vm315, %v1056, 0.0
        %1082 = vadd.xlane.f32.xlu0 %v1081
        %v1083 = vpop.xlane.xlu0 %1082
        %v1084 = vsel %vm315, %v1058, 0.0
        %1085 = vadd.xlane.f32.xlu0 %v1084
        %v1086 = vpop.xlane.xlu0 %1085
        %v1087 = vsel %vm315, %v1060, 0.0
        %1088 = vadd.xlane.f32.xlu0 %v1087
        %v1089 = vpop.xlane.xlu0 %1088
        %v1090 = vsel %vm315, %v1062, 0.0
        %1091 = vadd.xlane.f32.xlu0 %v1090
        %v1092 = vpop.xlane.xlu0 %1091
        %v1093 = vsel %vm315, %v1064, 0.0
        %1094 = vadd.xlane.f32.xlu0 %v1093
        %v1095 = vpop.xlane.xlu0 %1094
        %v1096 = vsel %vm315, %v1066, 0.0
        %1097 = vadd.xlane.f32.xlu0 %v1096
        %v1098 = vpop.xlane.xlu0 %1097
        %v1099 = vmul.f32 %v1077, %v346
        %v1100 = vmul.f32 %v1080, %v346
        %v1101 = vmul.f32 %v1083, %v346
        %v1102 = vmul.f32 %v1086, %v346
        %v1103 = vmul.f32 %v1089, %v346
        %v1104 = vmul.f32 %v1092, %v346
        %v1105 = vmul.f32 %v1095, %v346
        %v1106 = vmul.f32 %v1098, %v346
        %v1107 = vadd.f32 %v1099, 1e-05
        %v1108 = vadd.f32 %v1100, 1e-05
        %v1109 = vadd.f32 %v1101, 1e-05
        %v1110 = vadd.f32 %v1102, 1e-05
        %v1111 = vadd.f32 %v1103, 1e-05
        %v1112 = vadd.f32 %v1104, 1e-05
        %v1113 = vadd.f32 %v1105, 1e-05
        %v1114 = vadd.f32 %v1106, 1e-05
        %v1115 = vrsqrt.pop %v1107
        %v1116 = vmul.f32 %v1115, %v1107
        %v1117 = vmul.f32 %v1116, %v1115
        %v1118 = vmul.f32 0.5, %v1117
        %v1119 = vsub.f32 1.5, %v1118
        %v1120 = vmul.f32 %v1115, %v1119
        %vm1121 = vweird.f32 %v1107
        %vm1122 = vweird.f32 %v1115
        %vm1123 = vmor %vm1121, %vm1122
        %v1124 = vsel %vm1123, %v1115, %v1120
        %v1125 = vrsqrt.pop %v1108
        %v1126 = vmul.f32 %v1125, %v1108
        %v1127 = vmul.f32 %v1126, %v1125
        %v1128 = vmul.f32 0.5, %v1127
        %v1129 = vsub.f32 1.5, %v1128
        %v1130 = vmul.f32 %v1125, %v1129
        %vm1131 = vweird.f32 %v1108
        %vm1132 = vweird.f32 %v1125
        %vm1133 = vmor %vm1131, %vm1132
        %v1134 = vsel %vm1133, %v1125, %v1130
        %v1135 = vrsqrt.pop %v1109
        %v1136 = vmul.f32 %v1135, %v1109
        %v1137 = vmul.f32 %v1136, %v1135
        %v1138 = vmul.f32 0.5, %v1137
        %v1139 = vsub.f32 1.5, %v1138
        %v1140 = vmul.f32 %v1135, %v1139
        %vm1141 = vweird.f32 %v1109
        %vm1142 = vweird.f32 %v1135
        %vm1143 = vmor %vm1141, %vm1142
        %v1144 = vsel %vm1143, %v1135, %v1140
        %v1145 = vrsqrt.pop %v1110
        %v1146 = vmul.f32 %v1145, %v1110
        %v1147 = vmul.f32 %v1146, %v1145
        %v1148 = vmul.f32 0.5, %v1147
        %v1149 = vsub.f32 1.5, %v1148
        %v1150 = vmul.f32 %v1145, %v1149
        %vm1151 = vweird.f32 %v1110
        %vm1152 = vweird.f32 %v1145
        %vm1153 = vmor %vm1151, %vm1152
        %v1154 = vsel %vm1153, %v1145, %v1150
        %v1155 = vrsqrt.pop %v1111
        %v1156 = vmul.f32 %v1155, %v1111
        %v1157 = vmul.f32 %v1156, %v1155
        %v1158 = vmul.f32 0.5, %v1157
        %v1159 = vsub.f32 1.5, %v1158
        %v1160 = vmul.f32 %v1155, %v1159
        %vm1161 = vweird.f32 %v1111
        %vm1162 = vweird.f32 %v1155
        %vm1163 = vmor %vm1161, %vm1162
        %v1164 = vsel %vm1163, %v1155, %v1160
        %v1165 = vrsqrt.pop %v1112
        %v1166 = vmul.f32 %v1165, %v1112
        %v1167 = vmul.f32 %v1166, %v1165
        %v1168 = vmul.f32 0.5, %v1167
        %v1169 = vsub.f32 1.5, %v1168
        %v1170 = vmul.f32 %v1165, %v1169
        %vm1171 = vweird.f32 %v1112
        %vm1172 = vweird.f32 %v1165
        %vm1173 = vmor %vm1171, %vm1172
        %v1174 = vsel %vm1173, %v1165, %v1170
        %v1175 = vrsqrt.pop %v1113
        %v1176 = vmul.f32 %v1175, %v1113
        %v1177 = vmul.f32 %v1176, %v1175
        %v1178 = vmul.f32 0.5, %v1177
        %v1179 = vsub.f32 1.5, %v1178
        %v1180 = vmul.f32 %v1175, %v1179
        %vm1181 = vweird.f32 %v1113
        %vm1182 = vweird.f32 %v1175
        %vm1183 = vmor %vm1181, %vm1182
        %v1184 = vsel %vm1183, %v1175, %v1180
        %v1185 = vrsqrt.pop %v1114
        %v1186 = vmul.f32 %v1185, %v1114
        %v1187 = vmul.f32 %v1186, %v1185
        %v1188 = vmul.f32 0.5, %v1187
        %v1189 = vsub.f32 1.5, %v1188
        %v1190 = vmul.f32 %v1185, %v1189
        %vm1191 = vweird.f32 %v1114
        %vm1192 = vweird.f32 %v1185
        %vm1193 = vmor %vm1191, %vm1192
        %v1194 = vsel %vm1193, %v1185, %v1190
        %v1195 = vmul.f32 %v1027, %v1124
        %v1196 = vmul.f32 %v1028, %v1134
        %v1197 = vmul.f32 %v1029, %v1144
        %v1198 = vmul.f32 %v1030, %v1154
        %v1199 = vmul.f32 %v1031, %v1164
        %v1200 = vmul.f32 %v1032, %v1174
        %v1201 = vmul.f32 %v1033, %v1184
        %v1202 = vmul.f32 %v1034, %v1194
        %v1203 = vsel %vm315, %v491, %v731
        %v1204 = vsel %vm315, %v492, %v732
        %v1205 = vsel %vm315, %v493, %v733
        %v1206 = vsel %vm315, %v494, %v734
        %v1207 = vsel %vm315, %v495, %v735
        %v1208 = vsel %vm315, %v496, %v736
        %v1209 = vsel %vm315, %v497, %v737
        %v1210 = vsel %vm315, %v498, %v738
        %v1211 = vsel %vm249, %v1203, %v963
        %v1212 = vsel %vm249, %v1204, %v964
        %v1213 = vsel %vm249, %v1205, %v965
        %v1214 = vsel %vm249, %v1206, %v966
        %v1215 = vsel %vm249, %v1207, %v967
        %v1216 = vsel %vm249, %v1208, %v968
        %v1217 = vsel %vm249, %v1209, %v969
        %v1218 = vsel %vm249, %v1210, %v970
        %vm1219 = vcmask 392192
        %v1220 = vsel %vm1219, %v1211, %v1195
        %v1221 = vsel %vm1219, %v1212, %v1196
        %v1222 = vsel %vm1219, %v1213, %v1197
        %v1223 = vsel %vm1219, %v1214, %v1198
        %v1224 = vsel %vm1219, %v1215, %v1199
        %v1225 = vsel %vm1219, %v1216, %v1200
        %v1226 = vsel %vm1219, %v1217, %v1201
        %v1227 = vsel %vm1219, %v1218, %v1202
        %v1228 = vld [vmem:[%s2] sm:$0x1]
        %v1230 = vperm.slane %v1228, 0
        %v1232 = vmul.f32 %v1220, %v1230
        %v1233 = vmul.f32 %v1221, %v1230
        %v1234 = vmul.f32 %v1222, %v1230
        %v1235 = vmul.f32 %v1223, %v1230
        %v1236 = vmul.f32 %v1224, %v1230
        %v1237 = vmul.f32 %v1225, %v1230
        %v1238 = vmul.f32 %v1226, %v1230
        %v1239 = vmul.f32 %v1227, %v1230
        %v1240 = vld [vmem:[%s3] sm:$0x1]
        %v1242 = vperm.slane %v1240, 0
        %v1244 = vadd.f32 %v1232, %v1242
        %v1245 = vadd.f32 %v1233, %v1242
        %v1246 = vadd.f32 %v1234, %v1242
        %v1247 = vadd.f32 %v1235, %v1242
        %v1248 = vadd.f32 %v1236, %v1242
        %v1249 = vadd.f32 %v1237, %v1242
        %v1250 = vadd.f32 %v1238, %v1242
        %v1251 = vadd.f32 %v1239, %v1242
        %1252 = vst.msk [vmem:[%s234] sm:$0xff] %vm249, %v1244
        %1254 = vrot.lane.b32.xlu0 %v1244, 96
        %v1255 = vpop.permute.xlu0 %1254
        %s1257 = scalar_lea.vmem %s234, 8 [#allocation7]
        %1258 = vst.msk [vmem:[%s1257] sm:$0xff] %vm249, %v1255
        %s1259 = scalar_lea.vmem %s234, 16 [#allocation7]
        %1260 = vst.msk [vmem:[%s1259] sm:$0xff] %vm249, %v1245
        %1262 = vrot.lane.b32.xlu0 %v1245, 96
        %v1263 = vpop.permute.xlu0 %1262
        %s1265 = scalar_lea.vmem %s234, 24 [#allocation7]
        %1266 = vst.msk [vmem:[%s1265] sm:$0xff] %vm249, %v1263
        %s1267 = scalar_lea.vmem %s234, 32 [#allocation7]
        %1268 = vst.msk [vmem:[%s1267] sm:$0xff] %vm249, %v1246
        %1270 = vrot.lane.b32.xlu0 %v1246, 96
        %v1271 = vpop.permute.xlu0 %1270
        %s1273 = scalar_lea.vmem %s234, 40 [#allocation7]
        %1274 = vst.msk [vmem:[%s1273] sm:$0xff] %vm249, %v1271
        %s1275 = scalar_lea.vmem %s234, 48 [#allocation7]
        %1276 = vst.msk [vmem:[%s1275] sm:$0xff] %vm249, %v1247
        %1278 = vrot.lane.b32.xlu0 %v1247, 96
        %v1279 = vpop.permute.xlu0 %1278
        %s1281 = scalar_lea.vmem %s234, 56 [#allocation7]
        %1282 = vst.msk [vmem:[%s1281] sm:$0xff] %vm249, %v1279
        %s1283 = scalar_lea.vmem %s234, 64 [#allocation7]
        %1284 = vst.msk [vmem:[%s1283] sm:$0xff] %vm249, %v1248
        %1286 = vrot.lane.b32.xlu0 %v1248, 96
        %v1287 = vpop.permute.xlu0 %1286
        %s1289 = scalar_lea.vmem %s234, 72 [#allocation7]
        %1290 = vst.msk [vmem:[%s1289] sm:$0xff] %vm249, %v1287
        %s1291 = scalar_lea.vmem %s234, 80 [#allocation7]
        %1292 = vst.msk [vmem:[%s1291] sm:$0xff] %vm249, %v1249
        %1294 = vrot.lane.b32.xlu0 %v1249, 96
        %v1295 = vpop.permute.xlu0 %1294
        %s1297 = scalar_lea.vmem %s234, 88 [#allocation7]
        %1298 = vst.msk [vmem:[%s1297] sm:$0xff] %vm249, %v1295
        %s1299 = scalar_lea.vmem %s234, 96 [#allocation7]
        %1300 = vst.msk [vmem:[%s1299] sm:$0xff] %vm249, %v1250
        %1302 = vrot.lane.b32.xlu0 %v1250, 96
        %v1303 = vpop.permute.xlu0 %1302
        %s1305 = scalar_lea.vmem %s234, 104 [#allocation7]
        %1306 = vst.msk [vmem:[%s1305] sm:$0xff] %vm249, %v1303
        %s1307 = scalar_lea.vmem %s234, 112 [#allocation7]
        %1308 = vst.msk [vmem:[%s1307] sm:$0xff] %vm249, %v1251
        %1310 = vrot.lane.b32.xlu0 %v1251, 96
        %v1311 = vpop.permute.xlu0 %1310
        %s1313 = scalar_lea.vmem %s234, 120 [#allocation7]
        %1314 = vst.msk [vmem:[%s1313] sm:$0xff] %vm249, %v1311
        %s1315 = sand.u32 %s119, 1
        %s1316 = scalar_lea.sflag [#allocation4], %s1315
        %s1317 = sand.u32 %s119, 1
        %s1318 = smul.addr %s1317, 128
        %s1319 = scalar_lea.vmem [#allocation7], %s1318
        // Predicated region
        $region45: #{tpu_custom_call.1} parent=35 // pred_check
          %p1320 = pneg %p129
        $region46: #{tpu_custom_call.1} parent=35 // pred_check_branch
          %1322 = sbr.rel (%p1320) target = $region48
        $region47: #{tpu_custom_call.1} parent=35 // pred_region
          %s1323 = smul.u32 16, %s22
          %1325 = vsyncadd %s1316, 0
          %s1326 = smul.addr %s1323, 8
          %s1327 = scalar_lea.hbm %s4, %s1326
          %s1328 = sshll.u32 %s1319, 4
          %s1329 = int_to_ptr.vmem [resolvable:$true] %s1328
          %s1330 = sshll.u32 %s1327, 4
          %s1331 = int_to_ptr.hbm [resolvable:$true] %s1330
          %1336 = dma.vmem_to_hbm [thread:$0]  %s1329, 2048, %s1331, %s1316, 128, 128, 8
        $region48: #{tpu_custom_call.1} parent=35 // pred_fallthru
          _
      $region36: #{tpu_custom_call.1} parent=5 // pred_fallthru
        _
      %p1337 = scmp.le.s32.totalorder 2, %s17
      // Predicated region
      $region49: #{tpu_custom_call.1} parent=5 // pred_check
        %p1338 = pneg %p1337
      $region50: #{tpu_custom_call.1} parent=5 // pred_check_branch
        %1340 = sbr.rel (%p1338) target = $region52
      $region51: #{tpu_custom_call.1} parent=5 // pred_region
        %s1341 = ssub.s32 %s17, 2
        // Predicated region
        $region53: #{tpu_custom_call.1} parent=51 // pred_check
          %p1342 = pneg %p135
        $region54: #{tpu_custom_call.1} parent=51 // pred_check_branch
          %1344 = sbr.rel (%p1342) target = $region56
        $region55: #{tpu_custom_call.1} parent=51 // pred_region
          %s1345 = sand.u32 %s120, 1
          %s1346 = scalar_lea.sflag [#allocation4], %s1345
          %s1347 = sand.u32 %s120, 1
          %s1348 = smul.addr %s1347, 128
          %s1349 = scalar_lea.vmem [#allocation7], %s1348
          %1351 = dma.done %s1346, 2048
        $region56: #{tpu_custom_call.1} parent=51 // pred_fallthru
          _
      $region52: #{tpu_custom_call.1} parent=5 // pred_fallthru
        _
    $region6: #{tpu_custom_call.1} parent=1 // loop_footer
      %s21 = sadd.s32 1, %s17
    $region7: #{tpu_custom_call.1} parent=1 // loop_footer_branch
      %16 = sbr.rel target = $region3
    $region8: #{tpu_custom_call.1} parent=1 // loop_exit
      _
    %1352 = vsyncpa [#allocation3], 1
    %s1353 = scalar_lea.sflag [#allocation3], 1
    %1354 = vsyncpa %s1353, 1
    %1355 = vsyncpa [#allocation6], 1
    %1356 = vsyncpa [#allocation4], 1
    %s1357 = scalar_lea.sflag [#allocation4], 1
    %1358 = vsyncpa %s1357, 1

</llo_original>
